<compile_context>
chip_gen: v5e
topology: v5e:2x2
jax: 0.10.0
libtpu: 0.0.40
codegen_flags: <defaults>
</compile_context>

<pallas_src>
import jax
import jax.numpy as jnp
from jax.experimental import pallas as pl
from jax.experimental.pallas import tpu as pltpu

# ----------------------------- small ViT config ------------------------------
BATCH = 2
CHANNELS = 3
IMG = 16
PATCH = 8
NUM_PATCHES = (IMG // PATCH) ** 2            # 4
SEQ = NUM_PATCHES + 1                        # 5 (CLS + patches)
BS = BATCH * SEQ                             # 10 flattened rows
HIDDEN = 32
NUM_HEADS = 4
HEAD_DIM = HIDDEN // NUM_HEADS               # 8
MLP = 64
NUM_LAYERS = 2
NUM_LABELS = 4
LN_EPS = 1e-12                               # ViTConfig.layer_norm_eps
PATCH_DIM = CHANNELS * PATCH * PATCH         # 192

# ---------------- static slab row layout  [S_ROWS, HIDDEN] -------------------
# rows 0:PATCH_DIM            patch-embedding weight  [192, 32]
R_PATCH_B = PATCH_DIM                        # patch-embedding bias
R_CLS_TOK = R_PATCH_B + 1                    # cls token
R_FIN_G = R_CLS_TOK + 1                      # final layernorm gamma
R_FIN_B = R_FIN_G + 1                        # final layernorm beta
R_CLS_B = R_FIN_B + 1                        # classifier bias (lanes 0:NUM_LABELS)
R_POS = R_CLS_B + 1                          # position embeddings, SEQ rows
R_CLS_W = R_POS + SEQ                        # classifier weight [32, 0:NUM_LABELS]
R_ATT_BIAS = R_CLS_W + HIDDEN                # batch-block additive bias [10, 0:10]
S_ROWS = ((R_ATT_BIAS + BS + 7) // 8) * 8    # pad to multiple of 8 sublanes

# --------------- per-layer slab row layout [NUM_LAYERS, L_ROWS, 128] ---------
R_WATTN = 0                                  # 32 rows: [Wq*scale | Wk | Wv | Wo]
R_W1 = R_WATTN + HIDDEN                      # 32 rows: lanes 0:MLP    = W1
R_W2 = R_W1 + HIDDEN                         # 64 rows: lanes 0:HIDDEN = W2
R_VEC0 = R_W2 + MLP                          # [ln1_g | ln1_b | ln2_g | ln2_b]
R_VEC1 = R_VEC0 + 1                          # [b_q*scale | b_k | b_v | b_o]
R_VEC2 = R_VEC1 + 1                          # [b_1 (0:64) | b_2 (64:96) | 0]
L_ROWS = ((R_VEC2 + 1 + 7) // 8) * 8
L_LANES = 4 * HIDDEN                         # 128 -> lane-dense slab


def _vmem():
    # Everything is tiny -> whole-array blocks resident in VMEM, one grid step.
    return pl.BlockSpec(memory_space=pltpu.MemorySpace.VMEM)


# ------------------------------ kernel helpers --------------------------------
def _layernorm(x, g, b):
    mu = jnp.mean(x, axis=-1, keepdims=True)
    var = jnp.mean((x - mu) ** 2, axis=-1, keepdims=True)
    return (x - mu) * jax.lax.rsqrt(var + LN_EPS) * g + b


def _gelu_exact(x):
    # HF ViT uses exact (erf-based) GELU.
    return 0.5 * x * (1.0 + jax.lax.erf(x * (1.0 / jnp.sqrt(2.0).astype(x.dtype))))


# ------------------------------- fused kernel ---------------------------------
def fused_vit_kernel(patches_ref, static_ref, layers_ref, logits_ref):
    # ---- static slab slices (static slices of a whole-array VMEM ref) ----
    patch_w = static_ref[0:PATCH_DIM, :]                               # [192, 32]
    patch_b = static_ref[R_PATCH_B:R_PATCH_B + 1, :]                   # [1, 32]
    cls_tok = static_ref[R_CLS_TOK:R_CLS_TOK + 1, :]
    fin_g = static_ref[R_FIN_G:R_FIN_G + 1, :]
    fin_b = static_ref[R_FIN_B:R_FIN_B + 1, :]
    cls_b = static_ref[R_CLS_B:R_CLS_B + 1, 0:NUM_LABELS]              # [1, 4]
    pos = static_ref[R_POS:R_POS + SEQ, :]                             # [5, 32]
    cls_w = static_ref[R_CLS_W:R_CLS_W + HIDDEN, :]                    # [32, 32]
    attn_bias = static_ref[R_ATT_BIAS:R_ATT_BIAS + BS, 0:BS]           # [10, 10]

    # ---- patch-embedding "conv" as a single 2-D GEMM ----
    patch_emb = jnp.dot(patches_ref[...], patch_w,
                        preferred_element_type=jnp.float32) + patch_b  # [B*NP, 32]

    # ---- CLS prepend + positional embeddings, built directly in vregs ----
    pos_patch = jnp.concatenate([pos[1:SEQ, :]] * BATCH, axis=0)       # [B*NP, 32]
    patch_rows = patch_emb + pos_patch
    cls_row = cls_tok + pos[0:1, :]                                    # [1, 32]
    pieces = []
    for b in range(BATCH):                                             # static, B=2
        pieces.append(cls_row)
        pieces.append(patch_rows[b * NUM_PATCHES:(b + 1) * NUM_PATCHES, :])
    x = jnp.concatenate(pieces, axis=0)                                # [B*S, 32]

    for layer in range(NUM_LAYERS):                                    # static unroll
        w_attn = layers_ref[layer, R_WATTN:R_WATTN + HIDDEN, :]        # [32, 128]
        w1 = layers_ref[layer, R_W1:R_W1 + HIDDEN, 0:MLP]              # [32, 64]
        w2 = layers_ref[layer, R_W2:R_W2 + MLP, 0:HIDDEN]              # [64, 32]
        vec0 = layers_ref[layer, R_VEC0:R_VEC0 + 1, :]                 # [1, 128]
        vec1 = layers_ref[layer, R_VEC1:R_VEC1 + 1, :]                 # [1, 128]
        vec2 = layers_ref[layer, R_VEC2:R_VEC2 + 1, :]                 # [1, 128]
        ln1_g = vec0[:, 0:HIDDEN]
        ln1_b = vec0[:, HIDDEN:2 * HIDDEN]
        ln2_g = vec0[:, 2 * HIDDEN:3 * HIDDEN]
        ln2_b = vec0[:, 3 * HIDDEN:4 * HIDDEN]
        b_o = vec1[:, 3 * HIDDEN:4 * HIDDEN]
        b_1 = vec2[:, 0:MLP]
        b_2 = vec2[:, MLP:MLP + HIDDEN]

        # --- self-attention block (pre-LN), one fused QKV(+filler) MXU pass ---
        h1 = _layernorm(x, ln1_g, ln1_b)
        # lanes 0:32 = q (scale pre-folded), 32:64 = k, 64:96 = v, 96:128 unused
        qkvo = jnp.dot(h1, w_attn, preferred_element_type=jnp.float32) + vec1
        kT = qkvo[:, HIDDEN:2 * HIDDEN].T                              # [32, 10]

        scores = []
        for hd in range(NUM_HEADS):                                    # 4 K=8 matmuls
            q_h = qkvo[:, hd * HEAD_DIM:(hd + 1) * HEAD_DIM]           # [10, 8]
            kT_h = kT[hd * HEAD_DIM:(hd + 1) * HEAD_DIM, :]            # [8, 10]
            scores.append(jnp.dot(q_h, kT_h, preferred_element_type=jnp.float32))
        # single masked softmax chain for all heads (block-diag batch mask)
        s_all = jnp.stack(scores, axis=0) + attn_bias                  # [4, 10, 10]
        s_all = s_all - jnp.max(s_all, axis=-1, keepdims=True)
        p_all = jnp.exp(s_all)
        p_all = p_all / jnp.sum(p_all, axis=-1, keepdims=True)         # exact divide

        ctx_blocks = []
        for hd in range(NUM_HEADS):
            v_h = qkvo[:, 2 * HIDDEN + hd * HEAD_DIM:
                       2 * HIDDEN + (hd + 1) * HEAD_DIM]               # [10, 8]
            ctx_blocks.append(jnp.dot(p_all[hd], v_h,
                                      preferred_element_type=jnp.float32))
        ctx = jnp.concatenate(ctx_blocks, axis=-1)                     # [10, 32]
        # single fused output projection (K=32) instead of 4 K=8 matmuls + adds
        attn_out = jnp.dot(ctx, w_attn[:, 3 * HIDDEN:4 * HIDDEN],
                           preferred_element_type=jnp.float32) + b_o
        x = x + attn_out                                               # residual 1

        # --- MLP block (pre-LN) ---
        h2 = _layernorm(x, ln2_g, ln2_b)
        inter = _gelu_exact(jnp.dot(h2, w1,
                                    preferred_element_type=jnp.float32) + b_1)
        x = x + jnp.dot(inter, w2, preferred_element_type=jnp.float32) + b_2

    # --- final ViT layernorm on CLS rows only (equiv. to LN-then-slice) + head ---
    cls_rows = jnp.concatenate([x[b * SEQ:b * SEQ + 1, :] for b in range(BATCH)],
                               axis=0)                                 # [B, 32]
    cls_x = _layernorm(cls_rows, fin_g, fin_b)
    logits_full = jnp.dot(cls_x, cls_w, preferred_element_type=jnp.float32)  # [B, 32]
    logits_ref[...] = logits_full[:, 0:NUM_LABELS] + cls_b


# ------------------------------- Pallas wrapper --------------------------------
def fused_vit(patches, params):
    return pl.pallas_call(
        fused_vit_kernel,
        out_shape=jax.ShapeDtypeStruct((BATCH, NUM_LABELS), jnp.float32),
        in_specs=[_vmem(), _vmem(), _vmem()],
        out_specs=_vmem(),
    )(patches, params["static"], params["layers"])


# ------------------------------ parameter packing ------------------------------
def init_params(key):
    def nrm(k, shape, s=0.02):
        return (s * jax.random.normal(k, shape)).astype(jnp.float32)

    ks = iter(jax.random.split(key, 10))
    patch_w = nrm(next(ks), (PATCH_DIM, HIDDEN))
    cls_token = nrm(next(ks), (HIDDEN,))
    pos_embed = nrm(next(ks), (SEQ, HIDDEN))
    cls_w = nrm(next(ks), (HIDDEN, NUM_LABELS))

    # additive block-diagonal attention bias: 0 within a batch, -1e30 across batches
    row_b = jnp.arange(BS) // SEQ
    attn_bias = jnp.where(row_b[:, None] == row_b[None, :], 0.0, -1e30)

    static = jnp.zeros((S_ROWS, HIDDEN), jnp.float32)
    static = static.at[0:PATCH_DIM].set(patch_w)
    static = static.at[R_CLS_TOK].set(cls_token)
    static = static.at[R_FIN_G].set(1.0)                       # final LN gamma = 1
    static = static.at[R_POS:R_POS + SEQ].set(pos_embed)
    static = static.at[R_CLS_W:R_CLS_W + HIDDEN, 0:NUM_LABELS].set(cls_w)
    static = static.at[R_ATT_BIAS:R_ATT_BIAS + BS, 0:BS].set(attn_bias.astype(jnp.float32))
    # patch bias / final-LN beta / classifier bias rows stay zero.

    q_scale = 1.0 / (HEAD_DIM ** 0.5)                           # folded offline
    w_q = nrm(next(ks), (NUM_LAYERS, HIDDEN, HIDDEN)) * q_scale
    w_k = nrm(next(ks), (NUM_LAYERS, HIDDEN, HIDDEN))
    w_v = nrm(next(ks), (NUM_LAYERS, HIDDEN, HIDDEN))
    w_o = nrm(next(ks), (NUM_LAYERS, HIDDEN, HIDDEN))
    w1 = nrm(next(ks), (NUM_LAYERS, HIDDEN, MLP))
    w2 = nrm(next(ks), (NUM_LAYERS, MLP, HIDDEN))

    layers = jnp.zeros((NUM_LAYERS, L_ROWS, L_LANES), jnp.float32)
    layers = layers.at[:, R_WATTN:R_WATTN + HIDDEN, :].set(
        jnp.concatenate([w_q, w_k, w_v, w_o], axis=-1))         # [L, 32, 128]
    layers = layers.at[:, R_W1:R_W1 + HIDDEN, 0:MLP].set(w1)
    layers = layers.at[:, R_W2:R_W2 + MLP, 0:HIDDEN].set(w2)
    layers = layers.at[:, R_VEC0, 0:HIDDEN].set(1.0)            # ln1 gamma
    layers = layers.at[:, R_VEC0, 2 * HIDDEN:3 * HIDDEN].set(1.0)  # ln2 gamma
    # VEC1 (qkv/out-proj biases, q part pre-scaled) and VEC2 (MLP biases) stay zero.

    return dict(static=static, layers=layers)


# ----------------------------------- forward ------------------------------------
def vit_forward(pixel_values, params, labels=None):
    """Mirrors CustomViTForImageClassification.forward (eval mode, no dropout)."""
    B, C, Hm, Wm = pixel_values.shape
    nH, nW = Hm // PATCH, Wm // PATCH

    # Patch-embedding conv (kernel=stride=PATCH) == patch-extract + GEMM; the
    # extraction is layout plumbing in plain JAX, the GEMM and everything after
    # run inside the single fused Pallas kernel.
    patches = pixel_values.reshape(B, C, nH, PATCH, nW, PATCH)
    patches = patches.transpose(0, 2, 4, 1, 3, 5).reshape(
        B * nH * nW, C * PATCH * PATCH).astype(jnp.float32)

    logits = fused_vit(patches, params)

    loss = None
    if labels is not None:
        # BCEWithLogitsLoss (mean reduction), numerically stable form.
        z = logits
        y = labels.astype(jnp.float32)
        loss = jnp.mean(jnp.maximum(z, 0.0) - z * y + jnp.log1p(jnp.exp(-jnp.abs(z))))
    return loss, logits


# ------------------------------------ main ---------------------------------------
if __name__ == "__main__":
    key = jax.random.PRNGKey(0)
    k_params, k_pix, k_lab = jax.random.split(key, 3)

    params = init_params(k_params)
    pixel_values = jax.random.normal(
        k_pix, (BATCH, CHANNELS, IMG, IMG), dtype=jnp.float32
    )
    labels = jax.random.bernoulli(k_lab, 0.5, (BATCH, NUM_LABELS)).astype(jnp.float32)

    fwd = jax.jit(vit_forward)
    loss, logits = fwd(pixel_values, params, labels)
    jax.block_until_ready((loss, logits))

    assert logits.shape == (BATCH, NUM_LABELS)
    assert loss.shape == ()
    # TODO(synk): pretrained google/vit-base-patch16-224 weight loading has no
    # in-kernel equivalent; randomly initialized parameters are used instead.
    print("KERNEL_OK")
</pallas_src>

<mosaic_0001>
module attributes {stable_mosaic.version = 11 : i64} {
  func.func @fused_vit_kernel(%arg0: memref<8x192xf32, #tpu.memory_space<vmem>>, %arg1: memref<248x32xf32, #tpu.memory_space<vmem>>, %arg2: memref<2x136x128xf32, #tpu.memory_space<vmem>>, %arg3: memref<2x4xf32, #tpu.memory_space<vmem>>) attributes {dimension_semantics = [], scalar_prefetch = 0 : i64, scratch_operands = 0 : i64, tpu.core_type = #tpu.core_type<tc>} {
    %c0 = arith.constant 0 : index
    %c0_0 = arith.constant 0 : index
    %0 = vector.load %arg1[%c0, %c0_0] : memref<248x32xf32, #tpu.memory_space<vmem>>, vector<192x32xf32>
    %c192 = arith.constant 192 : index
    %c0_1 = arith.constant 0 : index
    %1 = vector.load %arg1[%c192, %c0_1] : memref<248x32xf32, #tpu.memory_space<vmem>>, vector<1x32xf32>
    %c193 = arith.constant 193 : index
    %c0_2 = arith.constant 0 : index
    %2 = vector.load %arg1[%c193, %c0_2] : memref<248x32xf32, #tpu.memory_space<vmem>>, vector<1x32xf32>
    %c194 = arith.constant 194 : index
    %c0_3 = arith.constant 0 : index
    %3 = vector.load %arg1[%c194, %c0_3] : memref<248x32xf32, #tpu.memory_space<vmem>>, vector<1x32xf32>
    %c195 = arith.constant 195 : index
    %c0_4 = arith.constant 0 : index
    %4 = vector.load %arg1[%c195, %c0_4] : memref<248x32xf32, #tpu.memory_space<vmem>>, vector<1x32xf32>
    %c196 = arith.constant 196 : index
    %c0_5 = arith.constant 0 : index
    %5 = vector.load %arg1[%c196, %c0_5] : memref<248x32xf32, #tpu.memory_space<vmem>>, vector<1x4xf32>
    %c197 = arith.constant 197 : index
    %c0_6 = arith.constant 0 : index
    %6 = vector.load %arg1[%c197, %c0_6] : memref<248x32xf32, #tpu.memory_space<vmem>>, vector<5x32xf32>
    %c202 = arith.constant 202 : index
    %c0_7 = arith.constant 0 : index
    %7 = vector.load %arg1[%c202, %c0_7] : memref<248x32xf32, #tpu.memory_space<vmem>>, vector<32x32xf32>
    %c234 = arith.constant 234 : index
    %c0_8 = arith.constant 0 : index
    %8 = vector.load %arg1[%c234, %c0_8] : memref<248x32xf32, #tpu.memory_space<vmem>>, vector<10x10xf32>
    %c0_9 = arith.constant 0 : index
    %c0_10 = arith.constant 0 : index
    %9 = vector.load %arg0[%c0_9, %c0_10] : memref<8x192xf32, #tpu.memory_space<vmem>>, vector<8x192xf32>
    %cst = arith.constant dense<0.000000e+00> : vector<8x32xf32>
    %10 = tpu.matmul %9, %0, %cst {dimension_numbers = #tpu.dot_dimension_numbers<[1], [0], [0], [1], [0, 0, 1, 1], [], []>} : vector<8x192xf32>, vector<192x32xf32>, vector<8x32xf32> -> vector<8x32xf32>
    %11 = vector.broadcast %1 : vector<1x32xf32> to vector<8x32xf32>
    %12 = arith.addf %10, %11 : vector<8x32xf32>
    %13 = vector.extract_strided_slice %6 {offsets = [1, 0], sizes = [4, 32], strides = [1, 1]} : vector<5x32xf32> to vector<4x32xf32>
    %14 = tpu.concatenate %13, %13 in 0 : vector<4x32xf32>, vector<4x32xf32> -> vector<8x32xf32>
    %15 = arith.addf %12, %14 : vector<8x32xf32>
    %16 = vector.extract_strided_slice %6 {offsets = [0, 0], sizes = [1, 32], strides = [1, 1]} : vector<5x32xf32> to vector<1x32xf32>
    %17 = arith.addf %2, %16 : vector<1x32xf32>
    %18 = vector.extract_strided_slice %15 {offsets = [0, 0], sizes = [4, 32], strides = [1, 1]} : vector<8x32xf32> to vector<4x32xf32>
    %19 = vector.extract_strided_slice %15 {offsets = [4, 0], sizes = [4, 32], strides = [1, 1]} : vector<8x32xf32> to vector<4x32xf32>
    %20 = tpu.concatenate %17, %18, %17, %19 in 0 : vector<1x32xf32>, vector<4x32xf32>, vector<1x32xf32>, vector<4x32xf32> -> vector<10x32xf32>
    %c0_11 = arith.constant 0 : index
    %c0_12 = arith.constant 0 : index
    %c0_13 = arith.constant 0 : index
    %21 = vector.load %arg2[%c0_11, %c0_12, %c0_13] : memref<2x136x128xf32, #tpu.memory_space<vmem>>, vector<1x32x128xf32>
    %22 = vector.shape_cast %21 : vector<1x32x128xf32> to vector<32x128xf32>
    %c0_14 = arith.constant 0 : index
    %c32 = arith.constant 32 : index
    %c0_15 = arith.constant 0 : index
    %23 = vector.load %arg2[%c0_14, %c32, %c0_15] : memref<2x136x128xf32, #tpu.memory_space<vmem>>, vector<1x32x64xf32>
    %24 = vector.shape_cast %23 : vector<1x32x64xf32> to vector<32x64xf32>
    %c0_16 = arith.constant 0 : index
    %c64 = arith.constant 64 : index
    %c0_17 = arith.constant 0 : index
    %25 = vector.load %arg2[%c0_16, %c64, %c0_17] : memref<2x136x128xf32, #tpu.memory_space<vmem>>, vector<1x64x32xf32>
    %26 = vector.shape_cast %25 : vector<1x64x32xf32> to vector<64x32xf32>
    %c0_18 = arith.constant 0 : index
    %c128 = arith.constant 128 : index
    %c0_19 = arith.constant 0 : index
    %27 = vector.load %arg2[%c0_18, %c128, %c0_19] : memref<2x136x128xf32, #tpu.memory_space<vmem>>, vector<1x1x128xf32>
    %28 = vector.shape_cast %27 : vector<1x1x128xf32> to vector<1x128xf32>
    %c0_20 = arith.constant 0 : index
    %c129 = arith.constant 129 : index
    %c0_21 = arith.constant 0 : index
    %29 = vector.load %arg2[%c0_20, %c129, %c0_21] : memref<2x136x128xf32, #tpu.memory_space<vmem>>, vector<1x1x128xf32>
    %30 = vector.shape_cast %29 : vector<1x1x128xf32> to vector<1x128xf32>
    %c0_22 = arith.constant 0 : index
    %c130 = arith.constant 130 : index
    %c0_23 = arith.constant 0 : index
    %31 = vector.load %arg2[%c0_22, %c130, %c0_23] : memref<2x136x128xf32, #tpu.memory_space<vmem>>, vector<1x1x128xf32>
    %32 = vector.shape_cast %31 : vector<1x1x128xf32> to vector<1x128xf32>
    %33 = vector.extract_strided_slice %28 {offsets = [0, 0], sizes = [1, 32], strides = [1, 1]} : vector<1x128xf32> to vector<1x32xf32>
    %34 = vector.extract_strided_slice %28 {offsets = [0, 32], sizes = [1, 32], strides = [1, 1]} : vector<1x128xf32> to vector<1x32xf32>
    %35 = vector.extract_strided_slice %28 {offsets = [0, 64], sizes = [1, 32], strides = [1, 1]} : vector<1x128xf32> to vector<1x32xf32>
    %36 = vector.extract_strided_slice %28 {offsets = [0, 96], sizes = [1, 32], strides = [1, 1]} : vector<1x128xf32> to vector<1x32xf32>
    %37 = vector.extract_strided_slice %30 {offsets = [0, 96], sizes = [1, 32], strides = [1, 1]} : vector<1x128xf32> to vector<1x32xf32>
    %38 = vector.extract_strided_slice %32 {offsets = [0, 0], sizes = [1, 64], strides = [1, 1]} : vector<1x128xf32> to vector<1x64xf32>
    %39 = vector.extract_strided_slice %32 {offsets = [0, 64], sizes = [1, 32], strides = [1, 1]} : vector<1x128xf32> to vector<1x32xf32>
    %cst_24 = arith.constant dense<0.000000e+00> : vector<10xf32>
    %40 = vector.multi_reduction <add>, %20, %cst_24 [1] : vector<10x32xf32> to vector<10xf32>
    %41 = vector.shape_cast %40 : vector<10xf32> to vector<10x1xf32>
    %cst_25 = arith.constant 3.200000e+01 : f32
    %42 = vector.broadcast %cst_25 : f32 to vector<10x1xf32>
    %43 = arith.divf %41, %42 : vector<10x1xf32>
    %44 = vector.broadcast %43 : vector<10x1xf32> to vector<10x32xf32>
    %45 = arith.subf %20, %44 : vector<10x32xf32>
    %46 = arith.mulf %45, %45 : vector<10x32xf32>
    %cst_26 = arith.constant dense<0.000000e+00> : vector<10xf32>
    %47 = vector.multi_reduction <add>, %46, %cst_26 [1] : vector<10x32xf32> to vector<10xf32>
    %48 = vector.shape_cast %47 : vector<10xf32> to vector<10x1xf32>
    %cst_27 = arith.constant 3.200000e+01 : f32
    %49 = vector.broadcast %cst_27 : f32 to vector<10x1xf32>
    %50 = arith.divf %48, %49 : vector<10x1xf32>
    %51 = vector.broadcast %43 : vector<10x1xf32> to vector<10x32xf32>
    %52 = arith.subf %20, %51 : vector<10x32xf32>
    %cst_28 = arith.constant 9.99999996E-13 : f32
    %53 = vector.broadcast %cst_28 : f32 to vector<10x1xf32>
    %54 = arith.addf %50, %53 : vector<10x1xf32>
    %55 = math.rsqrt %54 : vector<10x1xf32>
    %56 = vector.broadcast %55 : vector<10x1xf32> to vector<10x32xf32>
    %57 = arith.mulf %52, %56 : vector<10x32xf32>
    %58 = vector.broadcast %33 : vector<1x32xf32> to vector<10x32xf32>
    %59 = arith.mulf %57, %58 : vector<10x32xf32>
    %60 = vector.broadcast %34 : vector<1x32xf32> to vector<10x32xf32>
    %61 = arith.addf %59, %60 : vector<10x32xf32>
    %cst_29 = arith.constant dense<0.000000e+00> : vector<10x128xf32>
    %62 = tpu.matmul %61, %22, %cst_29 {dimension_numbers = #tpu.dot_dimension_numbers<[1], [0], [0], [1], [0, 0, 1, 1], [], []>} : vector<10x32xf32>, vector<32x128xf32>, vector<10x128xf32> -> vector<10x128xf32>
    %63 = vector.broadcast %30 : vector<1x128xf32> to vector<10x128xf32>
    %64 = arith.addf %62, %63 : vector<10x128xf32>
    %65 = vector.extract_strided_slice %64 {offsets = [0, 32], sizes = [10, 32], strides = [1, 1]} : vector<10x128xf32> to vector<10x32xf32>
    %66 = tpu.transpose %65, [1, 0] : vector<10x32xf32> -> vector<32x10xf32>
    %67 = vector.extract_strided_slice %64 {offsets = [0, 0], sizes = [10, 8], strides = [1, 1]} : vector<10x128xf32> to vector<10x8xf32>
    %68 = vector.extract_strided_slice %66 {offsets = [0, 0], sizes = [8, 10], strides = [1, 1]} : vector<32x10xf32> to vector<8x10xf32>
    %cst_30 = arith.constant dense<0.000000e+00> : vector<10x10xf32>
    %69 = tpu.matmul %67, %68, %cst_30 {dimension_numbers = #tpu.dot_dimension_numbers<[1], [0], [0], [1], [0, 0, 1, 1], [], []>} : vector<10x8xf32>, vector<8x10xf32>, vector<10x10xf32> -> vector<10x10xf32>
    %70 = vector.extract_strided_slice %64 {offsets = [0, 8], sizes = [10, 8], strides = [1, 1]} : vector<10x128xf32> to vector<10x8xf32>
    %71 = vector.extract_strided_slice %66 {offsets = [8, 0], sizes = [8, 10], strides = [1, 1]} : vector<32x10xf32> to vector<8x10xf32>
    %cst_31 = arith.constant dense<0.000000e+00> : vector<10x10xf32>
    %72 = tpu.matmul %70, %71, %cst_31 {dimension_numbers = #tpu.dot_dimension_numbers<[1], [0], [0], [1], [0, 0, 1, 1], [], []>} : vector<10x8xf32>, vector<8x10xf32>, vector<10x10xf32> -> vector<10x10xf32>
    %73 = vector.extract_strided_slice %64 {offsets = [0, 16], sizes = [10, 8], strides = [1, 1]} : vector<10x128xf32> to vector<10x8xf32>
    %74 = vector.extract_strided_slice %66 {offsets = [16, 0], sizes = [8, 10], strides = [1, 1]} : vector<32x10xf32> to vector<8x10xf32>
    %cst_32 = arith.constant dense<0.000000e+00> : vector<10x10xf32>
    %75 = tpu.matmul %73, %74, %cst_32 {dimension_numbers = #tpu.dot_dimension_numbers<[1], [0], [0], [1], [0, 0, 1, 1], [], []>} : vector<10x8xf32>, vector<8x10xf32>, vector<10x10xf32> -> vector<10x10xf32>
    %76 = vector.extract_strided_slice %64 {offsets = [0, 24], sizes = [10, 8], strides = [1, 1]} : vector<10x128xf32> to vector<10x8xf32>
    %77 = vector.extract_strided_slice %66 {offsets = [24, 0], sizes = [8, 10], strides = [1, 1]} : vector<32x10xf32> to vector<8x10xf32>
    %cst_33 = arith.constant dense<0.000000e+00> : vector<10x10xf32>
    %78 = tpu.matmul %76, %77, %cst_33 {dimension_numbers = #tpu.dot_dimension_numbers<[1], [0], [0], [1], [0, 0, 1, 1], [], []>} : vector<10x8xf32>, vector<8x10xf32>, vector<10x10xf32> -> vector<10x10xf32>
    %79 = vector.shape_cast %69 : vector<10x10xf32> to vector<1x10x10xf32>
    %80 = vector.shape_cast %72 : vector<10x10xf32> to vector<1x10x10xf32>
    %81 = vector.shape_cast %75 : vector<10x10xf32> to vector<1x10x10xf32>
    %82 = vector.shape_cast %78 : vector<10x10xf32> to vector<1x10x10xf32>
    %83 = tpu.concatenate %79, %80, %81, %82 in 0 : vector<1x10x10xf32>, vector<1x10x10xf32>, vector<1x10x10xf32>, vector<1x10x10xf32> -> vector<4x10x10xf32>
    %84 = vector.shape_cast %8 : vector<10x10xf32> to vector<1x10x10xf32>
    %85 = vector.broadcast %84 : vector<1x10x10xf32> to vector<4x10x10xf32>
    %86 = arith.addf %83, %85 : vector<4x10x10xf32>
    %cst_34 = arith.constant dense<0xFF800000> : vector<4x10xf32>
    %87 = vector.multi_reduction <maximumf>, %86, %cst_34 [2] : vector<4x10x10xf32> to vector<4x10xf32>
    %88 = vector.shape_cast %87 : vector<4x10xf32> to vector<4x10x1xf32>
    %89 = vector.broadcast %88 : vector<4x10x1xf32> to vector<4x10x10xf32>
    %90 = arith.subf %86, %89 : vector<4x10x10xf32>
    %91 = math.exp %90 : vector<4x10x10xf32>
    %cst_35 = arith.constant dense<0.000000e+00> : vector<4x10xf32>
    %92 = vector.multi_reduction <add>, %91, %cst_35 [2] : vector<4x10x10xf32> to vector<4x10xf32>
    %93 = vector.shape_cast %92 : vector<4x10xf32> to vector<4x10x1xf32>
    %94 = vector.broadcast %93 : vector<4x10x1xf32> to vector<4x10x10xf32>
    %95 = arith.divf %91, %94 : vector<4x10x10xf32>
    %96 = vector.extract_strided_slice %64 {offsets = [0, 64], sizes = [10, 8], strides = [1, 1]} : vector<10x128xf32> to vector<10x8xf32>
    %97 = vector.extract_strided_slice %95 {offsets = [0, 0, 0], sizes = [1, 10, 10], strides = [1, 1, 1]} : vector<4x10x10xf32> to vector<1x10x10xf32>
    %98 = vector.shape_cast %97 : vector<1x10x10xf32> to vector<10x10xf32>
    %cst_36 = arith.constant dense<0.000000e+00> : vector<10x8xf32>
    %99 = tpu.matmul %98, %96, %cst_36 {dimension_numbers = #tpu.dot_dimension_numbers<[1], [0], [0], [1], [0, 0, 1, 1], [], []>} : vector<10x10xf32>, vector<10x8xf32>, vector<10x8xf32> -> vector<10x8xf32>
    %100 = vector.extract_strided_slice %64 {offsets = [0, 72], sizes = [10, 8], strides = [1, 1]} : vector<10x128xf32> to vector<10x8xf32>
    %101 = vector.extract_strided_slice %95 {offsets = [1, 0, 0], sizes = [1, 10, 10], strides = [1, 1, 1]} : vector<4x10x10xf32> to vector<1x10x10xf32>
    %102 = vector.shape_cast %101 : vector<1x10x10xf32> to vector<10x10xf32>
    %cst_37 = arith.constant dense<0.000000e+00> : vector<10x8xf32>
    %103 = tpu.matmul %102, %100, %cst_37 {dimension_numbers = #tpu.dot_dimension_numbers<[1], [0], [0], [1], [0, 0, 1, 1], [], []>} : vector<10x10xf32>, vector<10x8xf32>, vector<10x8xf32> -> vector<10x8xf32>
    %104 = vector.extract_strided_slice %64 {offsets = [0, 80], sizes = [10, 8], strides = [1, 1]} : vector<10x128xf32> to vector<10x8xf32>
    %105 = vector.extract_strided_slice %95 {offsets = [2, 0, 0], sizes = [1, 10, 10], strides = [1, 1, 1]} : vector<4x10x10xf32> to vector<1x10x10xf32>
    %106 = vector.shape_cast %105 : vector<1x10x10xf32> to vector<10x10xf32>
    %cst_38 = arith.constant dense<0.000000e+00> : vector<10x8xf32>
    %107 = tpu.matmul %106, %104, %cst_38 {dimension_numbers = #tpu.dot_dimension_numbers<[1], [0], [0], [1], [0, 0, 1, 1], [], []>} : vector<10x10xf32>, vector<10x8xf32>, vector<10x8xf32> -> vector<10x8xf32>
    %108 = vector.extract_strided_slice %64 {offsets = [0, 88], sizes = [10, 8], strides = [1, 1]} : vector<10x128xf32> to vector<10x8xf32>
    %109 = vector.extract_strided_slice %95 {offsets = [3, 0, 0], sizes = [1, 10, 10], strides = [1, 1, 1]} : vector<4x10x10xf32> to vector<1x10x10xf32>
    %110 = vector.shape_cast %109 : vector<1x10x10xf32> to vector<10x10xf32>
    %cst_39 = arith.constant dense<0.000000e+00> : vector<10x8xf32>
    %111 = tpu.matmul %110, %108, %cst_39 {dimension_numbers = #tpu.dot_dimension_numbers<[1], [0], [0], [1], [0, 0, 1, 1], [], []>} : vector<10x10xf32>, vector<10x8xf32>, vector<10x8xf32> -> vector<10x8xf32>
    %112 = tpu.concatenate %99, %103, %107, %111 in 1 : vector<10x8xf32>, vector<10x8xf32>, vector<10x8xf32>, vector<10x8xf32> -> vector<10x32xf32>
    %113 = vector.extract_strided_slice %22 {offsets = [0, 96], sizes = [32, 32], strides = [1, 1]} : vector<32x128xf32> to vector<32x32xf32>
    %cst_40 = arith.constant dense<0.000000e+00> : vector<10x32xf32>
    %114 = tpu.matmul %112, %113, %cst_40 {dimension_numbers = #tpu.dot_dimension_numbers<[1], [0], [0], [1], [0, 0, 1, 1], [], []>} : vector<10x32xf32>, vector<32x32xf32>, vector<10x32xf32> -> vector<10x32xf32>
    %115 = vector.broadcast %37 : vector<1x32xf32> to vector<10x32xf32>
    %116 = arith.addf %114, %115 : vector<10x32xf32>
    %117 = arith.addf %20, %116 : vector<10x32xf32>
    %cst_41 = arith.constant dense<0.000000e+00> : vector<10xf32>
    %118 = vector.multi_reduction <add>, %117, %cst_41 [1] : vector<10x32xf32> to vector<10xf32>
    %119 = vector.shape_cast %118 : vector<10xf32> to vector<10x1xf32>
    %cst_42 = arith.constant 3.200000e+01 : f32
    %120 = vector.broadcast %cst_42 : f32 to vector<10x1xf32>
    %121 = arith.divf %119, %120 : vector<10x1xf32>
    %122 = vector.broadcast %121 : vector<10x1xf32> to vector<10x32xf32>
    %123 = arith.subf %117, %122 : vector<10x32xf32>
    %124 = arith.mulf %123, %123 : vector<10x32xf32>
    %cst_43 = arith.constant dense<0.000000e+00> : vector<10xf32>
    %125 = vector.multi_reduction <add>, %124, %cst_43 [1] : vector<10x32xf32> to vector<10xf32>
    %126 = vector.shape_cast %125 : vector<10xf32> to vector<10x1xf32>
    %cst_44 = arith.constant 3.200000e+01 : f32
    %127 = vector.broadcast %cst_44 : f32 to vector<10x1xf32>
    %128 = arith.divf %126, %127 : vector<10x1xf32>
    %129 = vector.broadcast %121 : vector<10x1xf32> to vector<10x32xf32>
    %130 = arith.subf %117, %129 : vector<10x32xf32>
    %cst_45 = arith.constant 9.99999996E-13 : f32
    %131 = vector.broadcast %cst_45 : f32 to vector<10x1xf32>
    %132 = arith.addf %128, %131 : vector<10x1xf32>
    %133 = math.rsqrt %132 : vector<10x1xf32>
    %134 = vector.broadcast %133 : vector<10x1xf32> to vector<10x32xf32>
    %135 = arith.mulf %130, %134 : vector<10x32xf32>
    %136 = vector.broadcast %35 : vector<1x32xf32> to vector<10x32xf32>
    %137 = arith.mulf %135, %136 : vector<10x32xf32>
    %138 = vector.broadcast %36 : vector<1x32xf32> to vector<10x32xf32>
    %139 = arith.addf %137, %138 : vector<10x32xf32>
    %cst_46 = arith.constant dense<0.000000e+00> : vector<10x64xf32>
    %140 = tpu.matmul %139, %24, %cst_46 {dimension_numbers = #tpu.dot_dimension_numbers<[1], [0], [0], [1], [0, 0, 1, 1], [], []>} : vector<10x32xf32>, vector<32x64xf32>, vector<10x64xf32> -> vector<10x64xf32>
    %141 = vector.broadcast %38 : vector<1x64xf32> to vector<10x64xf32>
    %142 = arith.addf %140, %141 : vector<10x64xf32>
    %cst_47 = arith.constant 5.000000e-01 : f32
    %143 = vector.broadcast %cst_47 : f32 to vector<10x64xf32>
    %144 = arith.mulf %143, %142 : vector<10x64xf32>
    %cst_48 = arith.constant 2.000000e+00 : f32
    %145 = math.sqrt %cst_48 : f32
    %cst_49 = arith.constant 1.000000e+00 : f32
    %146 = arith.divf %cst_49, %145 : f32
    %147 = vector.broadcast %146 : f32 to vector<10x64xf32>
    %148 = arith.mulf %142, %147 : vector<10x64xf32>
    %149 = math.erf %148 : vector<10x64xf32>
    %cst_50 = arith.constant 1.000000e+00 : f32
    %150 = vector.broadcast %cst_50 : f32 to vector<10x64xf32>
    %151 = arith.addf %150, %149 : vector<10x64xf32>
    %152 = arith.mulf %144, %151 : vector<10x64xf32>
    %cst_51 = arith.constant dense<0.000000e+00> : vector<10x32xf32>
    %153 = tpu.matmul %152, %26, %cst_51 {dimension_numbers = #tpu.dot_dimension_numbers<[1], [0], [0], [1], [0, 0, 1, 1], [], []>} : vector<10x64xf32>, vector<64x32xf32>, vector<10x32xf32> -> vector<10x32xf32>
    %154 = arith.addf %117, %153 : vector<10x32xf32>
    %155 = vector.broadcast %39 : vector<1x32xf32> to vector<10x32xf32>
    %156 = arith.addf %154, %155 : vector<10x32xf32>
    %c1 = arith.constant 1 : index
    %c0_52 = arith.constant 0 : index
    %c0_53 = arith.constant 0 : index
    %157 = vector.load %arg2[%c1, %c0_52, %c0_53] : memref<2x136x128xf32, #tpu.memory_space<vmem>>, vector<1x32x128xf32>
    %158 = vector.shape_cast %157 : vector<1x32x128xf32> to vector<32x128xf32>
    %c1_54 = arith.constant 1 : index
    %c32_55 = arith.constant 32 : index
    %c0_56 = arith.constant 0 : index
    %159 = vector.load %arg2[%c1_54, %c32_55, %c0_56] : memref<2x136x128xf32, #tpu.memory_space<vmem>>, vector<1x32x64xf32>
    %160 = vector.shape_cast %159 : vector<1x32x64xf32> to vector<32x64xf32>
    %c1_57 = arith.constant 1 : index
    %c64_58 = arith.constant 64 : index
    %c0_59 = arith.constant 0 : index
    %161 = vector.load %arg2[%c1_57, %c64_58, %c0_59] : memref<2x136x128xf32, #tpu.memory_space<vmem>>, vector<1x64x32xf32>
    %162 = vector.shape_cast %161 : vector<1x64x32xf32> to vector<64x32xf32>
    %c1_60 = arith.constant 1 : index
    %c128_61 = arith.constant 128 : index
    %c0_62 = arith.constant 0 : index
    %163 = vector.load %arg2[%c1_60, %c128_61, %c0_62] : memref<2x136x128xf32, #tpu.memory_space<vmem>>, vector<1x1x128xf32>
    %164 = vector.shape_cast %163 : vector<1x1x128xf32> to vector<1x128xf32>
    %c1_63 = arith.constant 1 : index
    %c129_64 = arith.constant 129 : index
    %c0_65 = arith.constant 0 : index
    %165 = vector.load %arg2[%c1_63, %c129_64, %c0_65] : memref<2x136x128xf32, #tpu.memory_space<vmem>>, vector<1x1x128xf32>
    %166 = vector.shape_cast %165 : vector<1x1x128xf32> to vector<1x128xf32>
    %c1_66 = arith.constant 1 : index
    %c130_67 = arith.constant 130 : index
    %c0_68 = arith.constant 0 : index
    %167 = vector.load %arg2[%c1_66, %c130_67, %c0_68] : memref<2x136x128xf32, #tpu.memory_space<vmem>>, vector<1x1x128xf32>
    %168 = vector.shape_cast %167 : vector<1x1x128xf32> to vector<1x128xf32>
    %169 = vector.extract_strided_slice %164 {offsets = [0, 0], sizes = [1, 32], strides = [1, 1]} : vector<1x128xf32> to vector<1x32xf32>
    %170 = vector.extract_strided_slice %164 {offsets = [0, 32], sizes = [1, 32], strides = [1, 1]} : vector<1x128xf32> to vector<1x32xf32>
    %171 = vector.extract_strided_slice %164 {offsets = [0, 64], sizes = [1, 32], strides = [1, 1]} : vector<1x128xf32> to vector<1x32xf32>
    %172 = vector.extract_strided_slice %164 {offsets = [0, 96], sizes = [1, 32], strides = [1, 1]} : vector<1x128xf32> to vector<1x32xf32>
    %173 = vector.extract_strided_slice %166 {offsets = [0, 96], sizes = [1, 32], strides = [1, 1]} : vector<1x128xf32> to vector<1x32xf32>
    %174 = vector.extract_strided_slice %168 {offsets = [0, 0], sizes = [1, 64], strides = [1, 1]} : vector<1x128xf32> to vector<1x64xf32>
    %175 = vector.extract_strided_slice %168 {offsets = [0, 64], sizes = [1, 32], strides = [1, 1]} : vector<1x128xf32> to vector<1x32xf32>
    %cst_69 = arith.constant dense<0.000000e+00> : vector<10xf32>
    %176 = vector.multi_reduction <add>, %156, %cst_69 [1] : vector<10x32xf32> to vector<10xf32>
    %177 = vector.shape_cast %176 : vector<10xf32> to vector<10x1xf32>
    %cst_70 = arith.constant 3.200000e+01 : f32
    %178 = vector.broadcast %cst_70 : f32 to vector<10x1xf32>
    %179 = arith.divf %177, %178 : vector<10x1xf32>
    %180 = vector.broadcast %179 : vector<10x1xf32> to vector<10x32xf32>
    %181 = arith.subf %156, %180 : vector<10x32xf32>
    %182 = arith.mulf %181, %181 : vector<10x32xf32>
    %cst_71 = arith.constant dense<0.000000e+00> : vector<10xf32>
    %183 = vector.multi_reduction <add>, %182, %cst_71 [1] : vector<10x32xf32> to vector<10xf32>
    %184 = vector.shape_cast %183 : vector<10xf32> to vector<10x1xf32>
    %cst_72 = arith.constant 3.200000e+01 : f32
    %185 = vector.broadcast %cst_72 : f32 to vector<10x1xf32>
    %186 = arith.divf %184, %185 : vector<10x1xf32>
    %187 = vector.broadcast %179 : vector<10x1xf32> to vector<10x32xf32>
    %188 = arith.subf %156, %187 : vector<10x32xf32>
    %cst_73 = arith.constant 9.99999996E-13 : f32
    %189 = vector.broadcast %cst_73 : f32 to vector<10x1xf32>
    %190 = arith.addf %186, %189 : vector<10x1xf32>
    %191 = math.rsqrt %190 : vector<10x1xf32>
    %192 = vector.broadcast %191 : vector<10x1xf32> to vector<10x32xf32>
    %193 = arith.mulf %188, %192 : vector<10x32xf32>
    %194 = vector.broadcast %169 : vector<1x32xf32> to vector<10x32xf32>
    %195 = arith.mulf %193, %194 : vector<10x32xf32>
    %196 = vector.broadcast %170 : vector<1x32xf32> to vector<10x32xf32>
    %197 = arith.addf %195, %196 : vector<10x32xf32>
    %cst_74 = arith.constant dense<0.000000e+00> : vector<10x128xf32>
    %198 = tpu.matmul %197, %158, %cst_74 {dimension_numbers = #tpu.dot_dimension_numbers<[1], [0], [0], [1], [0, 0, 1, 1], [], []>} : vector<10x32xf32>, vector<32x128xf32>, vector<10x128xf32> -> vector<10x128xf32>
    %199 = vector.broadcast %166 : vector<1x128xf32> to vector<10x128xf32>
    %200 = arith.addf %198, %199 : vector<10x128xf32>
    %201 = vector.extract_strided_slice %200 {offsets = [0, 32], sizes = [10, 32], strides = [1, 1]} : vector<10x128xf32> to vector<10x32xf32>
    %202 = tpu.transpose %201, [1, 0] : vector<10x32xf32> -> vector<32x10xf32>
    %203 = vector.extract_strided_slice %200 {offsets = [0, 0], sizes = [10, 8], strides = [1, 1]} : vector<10x128xf32> to vector<10x8xf32>
    %204 = vector.extract_strided_slice %202 {offsets = [0, 0], sizes = [8, 10], strides = [1, 1]} : vector<32x10xf32> to vector<8x10xf32>
    %cst_75 = arith.constant dense<0.000000e+00> : vector<10x10xf32>
    %205 = tpu.matmul %203, %204, %cst_75 {dimension_numbers = #tpu.dot_dimension_numbers<[1], [0], [0], [1], [0, 0, 1, 1], [], []>} : vector<10x8xf32>, vector<8x10xf32>, vector<10x10xf32> -> vector<10x10xf32>
    %206 = vector.extract_strided_slice %200 {offsets = [0, 8], sizes = [10, 8], strides = [1, 1]} : vector<10x128xf32> to vector<10x8xf32>
    %207 = vector.extract_strided_slice %202 {offsets = [8, 0], sizes = [8, 10], strides = [1, 1]} : vector<32x10xf32> to vector<8x10xf32>
    %cst_76 = arith.constant dense<0.000000e+00> : vector<10x10xf32>
    %208 = tpu.matmul %206, %207, %cst_76 {dimension_numbers = #tpu.dot_dimension_numbers<[1], [0], [0], [1], [0, 0, 1, 1], [], []>} : vector<10x8xf32>, vector<8x10xf32>, vector<10x10xf32> -> vector<10x10xf32>
    %209 = vector.extract_strided_slice %200 {offsets = [0, 16], sizes = [10, 8], strides = [1, 1]} : vector<10x128xf32> to vector<10x8xf32>
    %210 = vector.extract_strided_slice %202 {offsets = [16, 0], sizes = [8, 10], strides = [1, 1]} : vector<32x10xf32> to vector<8x10xf32>
    %cst_77 = arith.constant dense<0.000000e+00> : vector<10x10xf32>
    %211 = tpu.matmul %209, %210, %cst_77 {dimension_numbers = #tpu.dot_dimension_numbers<[1], [0], [0], [1], [0, 0, 1, 1], [], []>} : vector<10x8xf32>, vector<8x10xf32>, vector<10x10xf32> -> vector<10x10xf32>
    %212 = vector.extract_strided_slice %200 {offsets = [0, 24], sizes = [10, 8], strides = [1, 1]} : vector<10x128xf32> to vector<10x8xf32>
    %213 = vector.extract_strided_slice %202 {offsets = [24, 0], sizes = [8, 10], strides = [1, 1]} : vector<32x10xf32> to vector<8x10xf32>
    %cst_78 = arith.constant dense<0.000000e+00> : vector<10x10xf32>
    %214 = tpu.matmul %212, %213, %cst_78 {dimension_numbers = #tpu.dot_dimension_numbers<[1], [0], [0], [1], [0, 0, 1, 1], [], []>} : vector<10x8xf32>, vector<8x10xf32>, vector<10x10xf32> -> vector<10x10xf32>
    %215 = vector.shape_cast %205 : vector<10x10xf32> to vector<1x10x10xf32>
    %216 = vector.shape_cast %208 : vector<10x10xf32> to vector<1x10x10xf32>
    %217 = vector.shape_cast %211 : vector<10x10xf32> to vector<1x10x10xf32>
    %218 = vector.shape_cast %214 : vector<10x10xf32> to vector<1x10x10xf32>
    %219 = tpu.concatenate %215, %216, %217, %218 in 0 : vector<1x10x10xf32>, vector<1x10x10xf32>, vector<1x10x10xf32>, vector<1x10x10xf32> -> vector<4x10x10xf32>
    %220 = vector.shape_cast %8 : vector<10x10xf32> to vector<1x10x10xf32>
    %221 = vector.broadcast %220 : vector<1x10x10xf32> to vector<4x10x10xf32>
    %222 = arith.addf %219, %221 : vector<4x10x10xf32>
    %cst_79 = arith.constant dense<0xFF800000> : vector<4x10xf32>
    %223 = vector.multi_reduction <maximumf>, %222, %cst_79 [2] : vector<4x10x10xf32> to vector<4x10xf32>
    %224 = vector.shape_cast %223 : vector<4x10xf32> to vector<4x10x1xf32>
    %225 = vector.broadcast %224 : vector<4x10x1xf32> to vector<4x10x10xf32>
    %226 = arith.subf %222, %225 : vector<4x10x10xf32>
    %227 = math.exp %226 : vector<4x10x10xf32>
    %cst_80 = arith.constant dense<0.000000e+00> : vector<4x10xf32>
    %228 = vector.multi_reduction <add>, %227, %cst_80 [2] : vector<4x10x10xf32> to vector<4x10xf32>
    %229 = vector.shape_cast %228 : vector<4x10xf32> to vector<4x10x1xf32>
    %230 = vector.broadcast %229 : vector<4x10x1xf32> to vector<4x10x10xf32>
    %231 = arith.divf %227, %230 : vector<4x10x10xf32>
    %232 = vector.extract_strided_slice %200 {offsets = [0, 64], sizes = [10, 8], strides = [1, 1]} : vector<10x128xf32> to vector<10x8xf32>
    %233 = vector.extract_strided_slice %231 {offsets = [0, 0, 0], sizes = [1, 10, 10], strides = [1, 1, 1]} : vector<4x10x10xf32> to vector<1x10x10xf32>
    %234 = vector.shape_cast %233 : vector<1x10x10xf32> to vector<10x10xf32>
    %cst_81 = arith.constant dense<0.000000e+00> : vector<10x8xf32>
    %235 = tpu.matmul %234, %232, %cst_81 {dimension_numbers = #tpu.dot_dimension_numbers<[1], [0], [0], [1], [0, 0, 1, 1], [], []>} : vector<10x10xf32>, vector<10x8xf32>, vector<10x8xf32> -> vector<10x8xf32>
    %236 = vector.extract_strided_slice %200 {offsets = [0, 72], sizes = [10, 8], strides = [1, 1]} : vector<10x128xf32> to vector<10x8xf32>
    %237 = vector.extract_strided_slice %231 {offsets = [1, 0, 0], sizes = [1, 10, 10], strides = [1, 1, 1]} : vector<4x10x10xf32> to vector<1x10x10xf32>
    %238 = vector.shape_cast %237 : vector<1x10x10xf32> to vector<10x10xf32>
    %cst_82 = arith.constant dense<0.000000e+00> : vector<10x8xf32>
    %239 = tpu.matmul %238, %236, %cst_82 {dimension_numbers = #tpu.dot_dimension_numbers<[1], [0], [0], [1], [0, 0, 1, 1], [], []>} : vector<10x10xf32>, vector<10x8xf32>, vector<10x8xf32> -> vector<10x8xf32>
    %240 = vector.extract_strided_slice %200 {offsets = [0, 80], sizes = [10, 8], strides = [1, 1]} : vector<10x128xf32> to vector<10x8xf32>
    %241 = vector.extract_strided_slice %231 {offsets = [2, 0, 0], sizes = [1, 10, 10], strides = [1, 1, 1]} : vector<4x10x10xf32> to vector<1x10x10xf32>
    %242 = vector.shape_cast %241 : vector<1x10x10xf32> to vector<10x10xf32>
    %cst_83 = arith.constant dense<0.000000e+00> : vector<10x8xf32>
    %243 = tpu.matmul %242, %240, %cst_83 {dimension_numbers = #tpu.dot_dimension_numbers<[1], [0], [0], [1], [0, 0, 1, 1], [], []>} : vector<10x10xf32>, vector<10x8xf32>, vector<10x8xf32> -> vector<10x8xf32>
    %244 = vector.extract_strided_slice %200 {offsets = [0, 88], sizes = [10, 8], strides = [1, 1]} : vector<10x128xf32> to vector<10x8xf32>
    %245 = vector.extract_strided_slice %231 {offsets = [3, 0, 0], sizes = [1, 10, 10], strides = [1, 1, 1]} : vector<4x10x10xf32> to vector<1x10x10xf32>
    %246 = vector.shape_cast %245 : vector<1x10x10xf32> to vector<10x10xf32>
    %cst_84 = arith.constant dense<0.000000e+00> : vector<10x8xf32>
    %247 = tpu.matmul %246, %244, %cst_84 {dimension_numbers = #tpu.dot_dimension_numbers<[1], [0], [0], [1], [0, 0, 1, 1], [], []>} : vector<10x10xf32>, vector<10x8xf32>, vector<10x8xf32> -> vector<10x8xf32>
    %248 = tpu.concatenate %235, %239, %243, %247 in 1 : vector<10x8xf32>, vector<10x8xf32>, vector<10x8xf32>, vector<10x8xf32> -> vector<10x32xf32>
    %249 = vector.extract_strided_slice %158 {offsets = [0, 96], sizes = [32, 32], strides = [1, 1]} : vector<32x128xf32> to vector<32x32xf32>
    %cst_85 = arith.constant dense<0.000000e+00> : vector<10x32xf32>
    %250 = tpu.matmul %248, %249, %cst_85 {dimension_numbers = #tpu.dot_dimension_numbers<[1], [0], [0], [1], [0, 0, 1, 1], [], []>} : vector<10x32xf32>, vector<32x32xf32>, vector<10x32xf32> -> vector<10x32xf32>
    %251 = vector.broadcast %173 : vector<1x32xf32> to vector<10x32xf32>
    %252 = arith.addf %250, %251 : vector<10x32xf32>
    %253 = arith.addf %156, %252 : vector<10x32xf32>
    %cst_86 = arith.constant dense<0.000000e+00> : vector<10xf32>
    %254 = vector.multi_reduction <add>, %253, %cst_86 [1] : vector<10x32xf32> to vector<10xf32>
    %255 = vector.shape_cast %254 : vector<10xf32> to vector<10x1xf32>
    %cst_87 = arith.constant 3.200000e+01 : f32
    %256 = vector.broadcast %cst_87 : f32 to vector<10x1xf32>
    %257 = arith.divf %255, %256 : vector<10x1xf32>
    %258 = vector.broadcast %257 : vector<10x1xf32> to vector<10x32xf32>
    %259 = arith.subf %253, %258 : vector<10x32xf32>
    %260 = arith.mulf %259, %259 : vector<10x32xf32>
    %cst_88 = arith.constant dense<0.000000e+00> : vector<10xf32>
    %261 = vector.multi_reduction <add>, %260, %cst_88 [1] : vector<10x32xf32> to vector<10xf32>
    %262 = vector.shape_cast %261 : vector<10xf32> to vector<10x1xf32>
    %cst_89 = arith.constant 3.200000e+01 : f32
    %263 = vector.broadcast %cst_89 : f32 to vector<10x1xf32>
    %264 = arith.divf %262, %263 : vector<10x1xf32>
    %265 = vector.broadcast %257 : vector<10x1xf32> to vector<10x32xf32>
    %266 = arith.subf %253, %265 : vector<10x32xf32>
    %cst_90 = arith.constant 9.99999996E-13 : f32
    %267 = vector.broadcast %cst_90 : f32 to vector<10x1xf32>
    %268 = arith.addf %264, %267 : vector<10x1xf32>
    %269 = math.rsqrt %268 : vector<10x1xf32>
    %270 = vector.broadcast %269 : vector<10x1xf32> to vector<10x32xf32>
    %271 = arith.mulf %266, %270 : vector<10x32xf32>
    %272 = vector.broadcast %171 : vector<1x32xf32> to vector<10x32xf32>
    %273 = arith.mulf %271, %272 : vector<10x32xf32>
    %274 = vector.broadcast %172 : vector<1x32xf32> to vector<10x32xf32>
    %275 = arith.addf %273, %274 : vector<10x32xf32>
    %cst_91 = arith.constant dense<0.000000e+00> : vector<10x64xf32>
    %276 = tpu.matmul %275, %160, %cst_91 {dimension_numbers = #tpu.dot_dimension_numbers<[1], [0], [0], [1], [0, 0, 1, 1], [], []>} : vector<10x32xf32>, vector<32x64xf32>, vector<10x64xf32> -> vector<10x64xf32>
    %277 = vector.broadcast %174 : vector<1x64xf32> to vector<10x64xf32>
    %278 = arith.addf %276, %277 : vector<10x64xf32>
    %cst_92 = arith.constant 5.000000e-01 : f32
    %279 = vector.broadcast %cst_92 : f32 to vector<10x64xf32>
    %280 = arith.mulf %279, %278 : vector<10x64xf32>
    %cst_93 = arith.constant 2.000000e+00 : f32
    %281 = math.sqrt %cst_93 : f32
    %cst_94 = arith.constant 1.000000e+00 : f32
    %282 = arith.divf %cst_94, %281 : f32
    %283 = vector.broadcast %282 : f32 to vector<10x64xf32>
    %284 = arith.mulf %278, %283 : vector<10x64xf32>
    %285 = math.erf %284 : vector<10x64xf32>
    %cst_95 = arith.constant 1.000000e+00 : f32
    %286 = vector.broadcast %cst_95 : f32 to vector<10x64xf32>
    %287 = arith.addf %286, %285 : vector<10x64xf32>
    %288 = arith.mulf %280, %287 : vector<10x64xf32>
    %cst_96 = arith.constant dense<0.000000e+00> : vector<10x32xf32>
    %289 = tpu.matmul %288, %162, %cst_96 {dimension_numbers = #tpu.dot_dimension_numbers<[1], [0], [0], [1], [0, 0, 1, 1], [], []>} : vector<10x64xf32>, vector<64x32xf32>, vector<10x32xf32> -> vector<10x32xf32>
    %290 = arith.addf %253, %289 : vector<10x32xf32>
    %291 = vector.broadcast %175 : vector<1x32xf32> to vector<10x32xf32>
    %292 = arith.addf %290, %291 : vector<10x32xf32>
    %293 = vector.extract_strided_slice %292 {offsets = [0, 0], sizes = [1, 32], strides = [1, 1]} : vector<10x32xf32> to vector<1x32xf32>
    %294 = vector.extract_strided_slice %292 {offsets = [5, 0], sizes = [1, 32], strides = [1, 1]} : vector<10x32xf32> to vector<1x32xf32>
    %295 = tpu.concatenate %293, %294 in 0 : vector<1x32xf32>, vector<1x32xf32> -> vector<2x32xf32>
    %cst_97 = arith.constant dense<0.000000e+00> : vector<2xf32>
    %296 = vector.multi_reduction <add>, %295, %cst_97 [1] : vector<2x32xf32> to vector<2xf32>
    %297 = vector.shape_cast %296 : vector<2xf32> to vector<2x1xf32>
    %cst_98 = arith.constant 3.200000e+01 : f32
    %298 = vector.broadcast %cst_98 : f32 to vector<2x1xf32>
    %299 = arith.divf %297, %298 : vector<2x1xf32>
    %300 = vector.broadcast %299 : vector<2x1xf32> to vector<2x32xf32>
    %301 = arith.subf %295, %300 : vector<2x32xf32>
    %302 = arith.mulf %301, %301 : vector<2x32xf32>
    %cst_99 = arith.constant dense<0.000000e+00> : vector<2xf32>
    %303 = vector.multi_reduction <add>, %302, %cst_99 [1] : vector<2x32xf32> to vector<2xf32>
    %304 = vector.shape_cast %303 : vector<2xf32> to vector<2x1xf32>
    %cst_100 = arith.constant 3.200000e+01 : f32
    %305 = vector.broadcast %cst_100 : f32 to vector<2x1xf32>
    %306 = arith.divf %304, %305 : vector<2x1xf32>
    %307 = vector.broadcast %299 : vector<2x1xf32> to vector<2x32xf32>
    %308 = arith.subf %295, %307 : vector<2x32xf32>
    %cst_101 = arith.constant 9.99999996E-13 : f32
    %309 = vector.broadcast %cst_101 : f32 to vector<2x1xf32>
    %310 = arith.addf %306, %309 : vector<2x1xf32>
    %311 = math.rsqrt %310 : vector<2x1xf32>
    %312 = vector.broadcast %311 : vector<2x1xf32> to vector<2x32xf32>
    %313 = arith.mulf %308, %312 : vector<2x32xf32>
    %314 = vector.broadcast %3 : vector<1x32xf32> to vector<2x32xf32>
    %315 = arith.mulf %313, %314 : vector<2x32xf32>
    %316 = vector.broadcast %4 : vector<1x32xf32> to vector<2x32xf32>
    %317 = arith.addf %315, %316 : vector<2x32xf32>
    %cst_102 = arith.constant dense<0.000000e+00> : vector<2x32xf32>
    %318 = tpu.matmul %317, %7, %cst_102 {dimension_numbers = #tpu.dot_dimension_numbers<[1], [0], [0], [1], [0, 0, 1, 1], [], []>} : vector<2x32xf32>, vector<32x32xf32>, vector<2x32xf32> -> vector<2x32xf32>
    %319 = vector.extract_strided_slice %318 {offsets = [0, 0], sizes = [2, 4], strides = [1, 1]} : vector<2x32xf32> to vector<2x4xf32>
    %320 = vector.broadcast %5 : vector<1x4xf32> to vector<2x4xf32>
    %321 = arith.addf %319, %320 : vector<2x4xf32>
    %c0_103 = arith.constant 0 : index
    %c0_104 = arith.constant 0 : index
    %322 = vector.load %arg3[%c0_103, %c0_104] : memref<2x4xf32, #tpu.memory_space<vmem>>, vector<2x4xf32>
    tpu.vector_store %arg3[%c0_103, %c0_104], %321 {strides = array<i32>} : memref<2x4xf32, #tpu.memory_space<vmem>>, vector<2x4xf32>,
    return
  }
}

</mosaic_0001>

<llo_original>
// kernel: vit_forward.1
$region0: #{vit_forward.1}
  #allocation0 [shape = 'u32[]', space=smem, size = 0x4, offset = 0x4, fixed_abs, tag = 'smem constant byte address 0x4 - core index']
  #allocation1 [shape = 'u32[72,128]{1,0:T(1,128)}', space=vmem, size = 0x9000, scoped, tag = 'internal scratch']
  %s0 = inlined_call_operand.vmem [shape: f32[8,192], index: 0, kind: input, shape index: {}]
  %s1 = inlined_call_operand.vmem [shape: f32[248,32], index: 1, kind: input, shape index: {}]
  %s2 = inlined_call_operand.vmem [shape: f32[2,136,128], index: 2, kind: input, shape index: {}]
  %s3 = inlined_call_operand.vmem [shape: f32[2,4], index: 3, kind: output, shape index: {}]
  %s4 = sld [smem:[#allocation0]]
  $region22: #{vit_forward.1} parent=0
    _
  %s6 = ssub.s32 1, %s4
  %s7 = scalar_select 0, %s6, %s4
  // Predicated region
  $region2: #{vit_forward.1} parent=0 // pred_check
    _
  $region3: #{vit_forward.1} parent=0 // pred_check_branch
    %9 = sbr.rel (0) target = $region5
  $region4: #{vit_forward.1} parent=0 // pred_region
    _
  $region5: #{vit_forward.1} parent=0 // pred_fallthru
    _
  // Predicated region
  $region6: #{vit_forward.1} parent=0 // pred_check
    _
  $region7: #{vit_forward.1} parent=0 // pred_check_branch
    %11 = sbr.rel (0) target = $region9
  $region8: #{vit_forward.1} parent=0 // pred_region
    _
  $region9: #{vit_forward.1} parent=0 // pred_fallthru
    _
  // Predicated region
  $region10: #{vit_forward.1} parent=0 // pred_check
    _
  $region11: #{vit_forward.1} parent=0 // pred_check_branch
    %13 = sbr.rel (0) target = $region13
  $region12: #{vit_forward.1} parent=0 // pred_region
    _
  $region13: #{vit_forward.1} parent=0 // pred_fallthru
    _
  %v14 = vld [vmem:[%s1] sm:$0xff]
  %v15 = vld [vmem:[%s1 + $0x8] sm:$0xff]
  %v16 = vld [vmem:[%s1 + $0x10] sm:$0xff]
  %v17 = vld [vmem:[%s1 + $0x18] sm:$0xff]
  %v18 = vld [vmem:[%s1 + $0x20] sm:$0xff]
  %v19 = vld [vmem:[%s1 + $0x28] sm:$0xff]
  %v20 = vld [vmem:[%s1 + $0x30] sm:$0xff]
  %v21 = vld [vmem:[%s1 + $0x38] sm:$0xff]
  %v22 = vld [vmem:[%s1 + $0x40] sm:$0xff]
  %v23 = vld [vmem:[%s1 + $0x48] sm:$0xff]
  %v24 = vld [vmem:[%s1 + $0x50] sm:$0xff]
  %v25 = vld [vmem:[%s1 + $0x58] sm:$0xff]
  %v26 = vld [vmem:[%s1 + $0x60] sm:$0xff]
  %v27 = vld [vmem:[%s1 + $0x68] sm:$0xff]
  %v28 = vld [vmem:[%s1 + $0x70] sm:$0xff]
  %v29 = vld [vmem:[%s1 + $0x78] sm:$0xff]
  %v30 = vld [vmem:[%s1 + $0x80] sm:$0xff]
  %v31 = vld [vmem:[%s1 + $0x88] sm:$0xff]
  %v32 = vld [vmem:[%s1 + $0x90] sm:$0xff]
  %v33 = vld [vmem:[%s1 + $0x98] sm:$0xff]
  %v34 = vld [vmem:[%s1 + $0xa0] sm:$0xff]
  %v35 = vld [vmem:[%s1 + $0xa8] sm:$0xff]
  %v36 = vld [vmem:[%s1 + $0xb0] sm:$0xff]
  %v37 = vld [vmem:[%s1 + $0xb8] sm:$0xff]
  %v38 = vld [vmem:[%s1 + $0xc0] sm:$0x1]
  %v39 = vld [vmem:[%s1 + $0xc1] sm:$0x1]
  %v40 = vld [vmem:[%s1 + $0xc2] sm:$0x1]
  %v41 = vld [vmem:[%s1 + $0xc3] sm:$0x1]
  %v42 = vld [vmem:[%s1 + $0xc4] sm:$0x1]
  %v43 = vld [vmem:[%s1 + $0xc5] sm:$0x1f]
  %v44 = vld [vmem:[%s1 + $0xca] sm:$0xff]
  %v45 = vld [vmem:[%s1 + $0xd2] sm:$0xff]
  %v46 = vld [vmem:[%s1 + $0xda] sm:$0xff]
  %v47 = vld [vmem:[%s1 + $0xe2] sm:$0xff]
  %v48 = vld [vmem:[%s1 + $0xea] sm:$0xff]
  %v49 = vld [vmem:[%s1 + $0xf2] sm:$0x3]
  %v50 = vld [vmem:[%s0] sm:$0xff]
  %v51 = vld [vmem:[%s0 + $0x8] sm:$0xff]
  %v52 = vperm.slane %v38, 0
  %vm53 = vcmask 523264
  %v55 = vsel %vm53, %v51, 0
  %57 = vmatpush.msra.mxu0 %v29
  %58 = vmatpush.msra.mxu0 %v28
  %59 = vmatpush.msra.mxu0 %v27
  %60 = vmatpush.msra.mxu0 %v26
  %61 = vmatpush.msra.mxu0 %v25
  %62 = vmatpush.msra.mxu0 %v24
  %63 = vmatpush.msra.mxu0 %v23
  %64 = vmatpush.msra.mxu0 %v22
  %65 = vmatpush.msra.mxu0 %v21
  %66 = vmatpush.msra.mxu0 %v20
  %67 = vmatpush.msra.mxu0 %v19
  %68 = vmatpush.msra.mxu0 %v18
  %69 = vmatpush.msra.mxu0 %v17
  %70 = vmatpush.msra.mxu0 %v16
  %71 = vmatpush.msra.mxu0 %v15
  %72 = vmatpush.msra.mxu0 %v14
  %73 = vmatmul.f32.gmra.mxu0 %v50
  %v74 = vpop.f32.mrf.mxu0
  %v75 = vadd.f32 %v52, %v74
  %76 = vdwg.mxu0
  %77 = vmatpush.msra.mxu0 0.0
  %78 = vmatpush.msra.mxu0 0.0
  %79 = vmatpush.msra.mxu0 0.0
  %80 = vmatpush.msra.mxu0 0.0
  %81 = vmatpush.msra.mxu0 0.0
  %82 = vmatpush.msra.mxu0 0.0
  %83 = vmatpush.msra.mxu0 0.0
  %84 = vmatpush.msra.mxu0 0.0
  %85 = vmatpush.msra.mxu0 %v37
  %86 = vmatpush.msra.mxu0 %v36
  %87 = vmatpush.msra.mxu0 %v35
  %88 = vmatpush.msra.mxu0 %v34
  %89 = vmatpush.msra.mxu0 %v33
  %90 = vmatpush.msra.mxu0 %v32
  %91 = vmatpush.msra.mxu0 %v31
  %92 = vmatpush.msra.mxu0 %v30
  %93 = vmatmul.f32.gmra.mxu0 %v55
  %v94 = vpop.f32.mrf.mxu0
  %v95 = vadd.f32 %v75, %v94
  %96 = vdwg.mxu0
  %v98 = vrot.slane %v43, 1
  %v100 = vrot.slane %v43, 5
  %vm102 = vcmask 1043456
  %v103 = vsel %vm102, %v98, %v100
  %v104 = vadd.f32 %v95, %v103
  %v105 = vadd.f32 %v39, %v43
  %v107 = vrot.slane %v104, 7
  %v110 = vrot.slane %v105, 3
  %v112 = vrot.slane %v104, 6
  %vm114 = vcmask 1040384
  %v115 = vsel %vm114, %v105, %v107
  %vm116 = vcmask 1044480
  %v117 = vsel %vm116, %v115, %v110
  %vm118 = vcmask 1045504
  %v119 = vsel %vm118, %v117, %v112
  %v120 = vld [vmem:[%s2] sm:$0xff]
  %v121 = vld [vmem:[%s2 + $0x8] sm:$0xff]
  %v122 = vld [vmem:[%s2 + $0x10] sm:$0xff]
  %v123 = vld [vmem:[%s2 + $0x18] sm:$0xff]
  %v124 = vld [vmem:[%s2 + $0x20] sm:$0xff]
  %v125 = vld [vmem:[%s2 + $0x28] sm:$0xff]
  %v126 = vld [vmem:[%s2 + $0x30] sm:$0xff]
  %v127 = vld [vmem:[%s2 + $0x38] sm:$0xff]
  %v128 = vld [vmem:[%s2 + $0x40] sm:$0xff]
  %v129 = vld [vmem:[%s2 + $0x48] sm:$0xff]
  %v130 = vld [vmem:[%s2 + $0x50] sm:$0xff]
  %v131 = vld [vmem:[%s2 + $0x58] sm:$0xff]
  %v132 = vld [vmem:[%s2 + $0x60] sm:$0xff]
  %v133 = vld [vmem:[%s2 + $0x68] sm:$0xff]
  %v134 = vld [vmem:[%s2 + $0x70] sm:$0xff]
  %v135 = vld [vmem:[%s2 + $0x78] sm:$0xff]
  %v136 = vld [vmem:[%s2 + $0x80] sm:$0x1]
  %v137 = vld [vmem:[%s2 + $0x81] sm:$0x1]
  %v138 = vld [vmem:[%s2 + $0x82] sm:$0x1]
  %vm139 = vcmask 261120
  %v140 = vsel %vm139, %v119, 0.0
  %141 = vadd.xlane.f32.xlu0 %v140
  %v142 = vpop.xlane.xlu0 %141
  %vm143 = vcmask 254976
  %v144 = vsel %vm143, %v112, 0.0
  %145 = vadd.xlane.f32.xlu0 %v144
  %v146 = vpop.xlane.xlu0 %145
  %v147 = vrcp.pop 32.0
  %v148 = vmul.f32 32.0, %v147
  %v149 = vsub.f32 1.0, %v148
  %v150 = vmul.f32 %v147, %v149
  %v151 = vadd.f32 %v147, %v150
  %vm152 = vweird.f32 %v147
  %v153 = vsel %vm152, %v147, %v151
  %v154 = vmul.f32 %v142, %v153
  %v155 = vmul.f32 %v146, %v153
  %v156 = vsub.f32 %v119, %v154
  %v157 = vsub.f32 %v112, %v155
  %v158 = vmul.f32 %v156, %v156
  %v159 = vmul.f32 %v157, %v157
  %v160 = vsel %vm139, %v158, 0.0
  %161 = vadd.xlane.f32.xlu0 %v160
  %v162 = vpop.xlane.xlu0 %161
  %v163 = vsel %vm143, %v159, 0.0
  %164 = vadd.xlane.f32.xlu0 %v163
  %v165 = vpop.xlane.xlu0 %164
  %v166 = vmul.f32 %v162, %v153
  %v167 = vmul.f32 %v165, %v153
  %v168 = vadd.f32 %v166, 1e-12
  %v169 = vadd.f32 %v167, 1e-12
  %v170 = vrsqrt.pop %v168
  %v171 = vmul.f32 %v170, %v168
  %v172 = vmul.f32 %v171, %v170
  %v173 = vmul.f32 0.5, %v172
  %v174 = vsub.f32 1.5, %v173
  %v175 = vmul.f32 %v170, %v174
  %vm176 = vweird.f32 %v168
  %vm177 = vweird.f32 %v170
  %vm178 = vmor %vm176, %vm177
  %v179 = vsel %vm178, %v170, %v175
  %v180 = vrsqrt.pop %v169
  %v181 = vmul.f32 %v180, %v169
  %v182 = vmul.f32 %v181, %v180
  %v183 = vmul.f32 0.5, %v182
  %v184 = vsub.f32 1.5, %v183
  %v185 = vmul.f32 %v180, %v184
  %vm186 = vweird.f32 %v169
  %vm187 = vweird.f32 %v180
  %vm188 = vmor %vm186, %vm187
  %v189 = vsel %vm188, %v180, %v185
  %v190 = vmul.f32 %v156, %v179
  %v191 = vmul.f32 %v157, %v189
  %v192 = vperm.slane %v136, 0
  %v193 = vmul.f32 %v190, %v192
  %v194 = vmul.f32 %v191, %v192
  %196 = vrot.lane.b32.xlu0 %v192, 96
  %v197 = vpop.permute.xlu0 %196
  %v199 = vadd.f32 %v193, %v197
  %v200 = vadd.f32 %v194, %v197
  %v201 = vperm.slane %v137, 0
  %v203 = vsel %vm139, %v199, 0
  %v206 = vsel %vm139, %v200, 0
  %208 = vmatpush.msra.mxu0 0.0
  %209 = vmatpush.msra.mxu0 0.0
  %210 = vmatpush.msra.mxu0 0.0
  %211 = vmatpush.msra.mxu0 0.0
  %212 = vmatpush.msra.mxu0 0.0
  %213 = vmatpush.msra.mxu0 0.0
  %214 = vmatpush.msra.mxu0 0.0
  %215 = vmatpush.msra.mxu0 0.0
  %216 = vmatpush.msra.mxu0 0.0
  %217 = vmatpush.msra.mxu0 0.0
  %218 = vmatpush.msra.mxu0 0.0
  %219 = vmatpush.msra.mxu0 0.0
  %220 = vmatpush.msra.mxu0 %v123
  %221 = vmatpush.msra.mxu0 %v122
  %222 = vmatpush.msra.mxu0 %v121
  %223 = vmatpush.msra.mxu0 %v120
  %224 = vmatmul.f32.gmra.mxu0 %v203
  %v225 = vpop.f32.mrf.mxu0
  %v226 = vadd.f32 %v201, %v225
  %227 = vmatmul.f32.gmra.mxu0 %v206
  %v228 = vpop.f32.mrf.mxu0
  %v229 = vadd.f32 %v201, %v228
  %230 = vdwg.mxu0
  %233 = vrot.lane.b32.xlu0 %v226, 96
  %v234 = vpop.permute.xlu0 %233
  %235 = vrot.lane.b32.xlu0 %v229, 96
  %v236 = vpop.permute.xlu0 %235
  %vm237 = vcmask 64512
  %v238 = vsel %vm237, %v226, 0
  %v240 = vsel %vm237, %v229, 0
  %v242 = vsel %vm237, %v234, 0
  %v244 = vsel %vm237, %v236, 0
  %246 = vmatpush.xpose.msra.mxu0 0.0
  %247 = vmatpush.xpose.msra.mxu0 0.0
  %248 = vmatpush.xpose.msra.mxu0 0.0
  %249 = vmatpush.xpose.msra.mxu0 0.0
  %250 = vmatpush.xpose.msra.mxu0 0.0
  %251 = vmatpush.xpose.msra.mxu0 0.0
  %252 = vmatpush.xpose.msra.mxu0 0.0
  %253 = vmatpush.xpose.msra.mxu0 0.0
  %254 = vmatpush.xpose.msra.mxu0 0.0
  %255 = vmatpush.xpose.msra.mxu0 0.0
  %256 = vmatpush.xpose.msra.mxu0 0.0
  %257 = vmatpush.xpose.msra.mxu0 0.0
  %258 = vmatpush.xpose.msra.mxu0 0.0
  %259 = vmatpush.xpose.msra.mxu0 0.0
  %260 = vmatpush.xpose.msra.mxu0 %v244
  %261 = vmatpush.xpose.msra.mxu0 %v242
  %262 = vmatmul.f32.gmra.mxu0 %v238
  %v263 = vpop.f32.mrf.mxu0
  %v264 = vadd.f32 0.0, %v263
  %265 = vmatmul.f32.gmra.mxu0 %v240
  %v266 = vpop.f32.mrf.mxu0
  %v267 = vadd.f32 0.0, %v266
  %268 = vdwg.mxu0
  %269 = vrot.lane.b32.xlu0 %v226, 120
  %v270 = vpop.permute.xlu0 %269
  %271 = vrot.lane.b32.xlu0 %v229, 120
  %v272 = vpop.permute.xlu0 %271
  %273 = vrot.lane.b32.xlu0 %v226, 88
  %v274 = vpop.permute.xlu0 %273
  %275 = vrot.lane.b32.xlu0 %v229, 88
  %v276 = vpop.permute.xlu0 %275
  %v277 = vsel %vm237, %v270, 0
  %v279 = vsel %vm237, %v272, 0
  %v281 = vsel %vm237, %v274, 0
  %v283 = vsel %vm237, %v276, 0
  %285 = vmatpush.xpose.msra.mxu0 0.0
  %286 = vmatpush.xpose.msra.mxu0 0.0
  %287 = vmatpush.xpose.msra.mxu0 0.0
  %288 = vmatpush.xpose.msra.mxu0 0.0
  %289 = vmatpush.xpose.msra.mxu0 0.0
  %290 = vmatpush.xpose.msra.mxu0 0.0
  %291 = vmatpush.xpose.msra.mxu0 0.0
  %292 = vmatpush.xpose.msra.mxu0 0.0
  %293 = vmatpush.xpose.msra.mxu0 0.0
  %294 = vmatpush.xpose.msra.mxu0 0.0
  %295 = vmatpush.xpose.msra.mxu0 0.0
  %296 = vmatpush.xpose.msra.mxu0 0.0
  %297 = vmatpush.xpose.msra.mxu0 0.0
  %298 = vmatpush.xpose.msra.mxu0 0.0
  %299 = vmatpush.xpose.msra.mxu0 %v283
  %300 = vmatpush.xpose.msra.mxu0 %v281
  %301 = vmatmul.f32.gmra.mxu0 %v277
  %v302 = vpop.f32.mrf.mxu0
  %v303 = vadd.f32 0.0, %v302
  %304 = vmatmul.f32.gmra.mxu0 %v279
  %v305 = vpop.f32.mrf.mxu0
  %v306 = vadd.f32 0.0, %v305
  %307 = vdwg.mxu0
  %308 = vrot.lane.b32.xlu0 %v226, 112
  %v309 = vpop.permute.xlu0 %308
  %310 = vrot.lane.b32.xlu0 %v229, 112
  %v311 = vpop.permute.xlu0 %310
  %312 = vrot.lane.b32.xlu0 %v226, 80
  %v313 = vpop.permute.xlu0 %312
  %314 = vrot.lane.b32.xlu0 %v229, 80
  %v315 = vpop.permute.xlu0 %314
  %v316 = vsel %vm237, %v309, 0
  %v318 = vsel %vm237, %v311, 0
  %v320 = vsel %vm237, %v313, 0
  %v322 = vsel %vm237, %v315, 0
  %324 = vmatpush.xpose.msra.mxu0 0.0
  %325 = vmatpush.xpose.msra.mxu0 0.0
  %326 = vmatpush.xpose.msra.mxu0 0.0
  %327 = vmatpush.xpose.msra.mxu0 0.0
  %328 = vmatpush.xpose.msra.mxu0 0.0
  %329 = vmatpush.xpose.msra.mxu0 0.0
  %330 = vmatpush.xpose.msra.mxu0 0.0
  %331 = vmatpush.xpose.msra.mxu0 0.0
  %332 = vmatpush.xpose.msra.mxu0 0.0
  %333 = vmatpush.xpose.msra.mxu0 0.0
  %334 = vmatpush.xpose.msra.mxu0 0.0
  %335 = vmatpush.xpose.msra.mxu0 0.0
  %336 = vmatpush.xpose.msra.mxu0 0.0
  %337 = vmatpush.xpose.msra.mxu0 0.0
  %338 = vmatpush.xpose.msra.mxu0 %v322
  %339 = vmatpush.xpose.msra.mxu0 %v320
  %340 = vmatmul.f32.gmra.mxu0 %v316
  %v341 = vpop.f32.mrf.mxu0
  %v342 = vadd.f32 0.0, %v341
  %343 = vmatmul.f32.gmra.mxu0 %v318
  %v344 = vpop.f32.mrf.mxu0
  %v345 = vadd.f32 0.0, %v344
  %346 = vdwg.mxu0
  %347 = vrot.lane.b32.xlu0 %v226, 104
  %v348 = vpop.permute.xlu0 %347
  %349 = vrot.lane.b32.xlu0 %v229, 104
  %v350 = vpop.permute.xlu0 %349
  %351 = vrot.lane.b32.xlu0 %v226, 72
  %v352 = vpop.permute.xlu0 %351
  %353 = vrot.lane.b32.xlu0 %v229, 72
  %v354 = vpop.permute.xlu0 %353
  %v355 = vsel %vm237, %v348, 0
  %v357 = vsel %vm237, %v350, 0
  %v359 = vsel %vm237, %v352, 0
  %v361 = vsel %vm237, %v354, 0
  %363 = vmatpush.xpose.msra.mxu0 0.0
  %364 = vmatpush.xpose.msra.mxu0 0.0
  %365 = vmatpush.xpose.msra.mxu0 0.0
  %366 = vmatpush.xpose.msra.mxu0 0.0
  %367 = vmatpush.xpose.msra.mxu0 0.0
  %368 = vmatpush.xpose.msra.mxu0 0.0
  %369 = vmatpush.xpose.msra.mxu0 0.0
  %370 = vmatpush.xpose.msra.mxu0 0.0
  %371 = vmatpush.xpose.msra.mxu0 0.0
  %372 = vmatpush.xpose.msra.mxu0 0.0
  %373 = vmatpush.xpose.msra.mxu0 0.0
  %374 = vmatpush.xpose.msra.mxu0 0.0
  %375 = vmatpush.xpose.msra.mxu0 0.0
  %376 = vmatpush.xpose.msra.mxu0 0.0
  %377 = vmatpush.xpose.msra.mxu0 %v361
  %378 = vmatpush.xpose.msra.mxu0 %v359
  %379 = vmatmul.f32.gmra.mxu0 %v355
  %v380 = vpop.f32.mrf.mxu0
  %v381 = vadd.f32 0.0, %v380
  %382 = vmatmul.f32.gmra.mxu0 %v357
  %v383 = vpop.f32.mrf.mxu0
  %v384 = vadd.f32 0.0, %v383
  %385 = vdwg.mxu0
  %v386 = vadd.f32 %v264, %v48
  %v387 = vadd.f32 %v267, %v49
  %v388 = vadd.f32 %v303, %v48
  %v389 = vadd.f32 %v306, %v49
  %v390 = vadd.f32 %v342, %v48
  %v391 = vadd.f32 %v345, %v49
  %v392 = vadd.f32 %v381, %v48
  %v393 = vadd.f32 %v384, %v49
  %vm394 = vcmask 80896
  %v395 = vsel %vm394, %v386, -inf
  %396 = vmax.xlane.f32.xlu0 %v395
  %v397 = vpop.xlane.xlu0 %396
  %vm398 = vcmask 74752
  %v399 = vsel %vm398, %v387, -inf
  %400 = vmax.xlane.f32.xlu0 %v399
  %v401 = vpop.xlane.xlu0 %400
  %v402 = vsel %vm394, %v388, -inf
  %403 = vmax.xlane.f32.xlu0 %v402
  %v404 = vpop.xlane.xlu0 %403
  %v405 = vsel %vm398, %v389, -inf
  %406 = vmax.xlane.f32.xlu0 %v405
  %v407 = vpop.xlane.xlu0 %406
  %v408 = vsel %vm394, %v390, -inf
  %409 = vmax.xlane.f32.xlu0 %v408
  %v410 = vpop.xlane.xlu0 %409
  %v411 = vsel %vm398, %v391, -inf
  %412 = vmax.xlane.f32.xlu0 %v411
  %v413 = vpop.xlane.xlu0 %412
  %v414 = vsel %vm394, %v392, -inf
  %415 = vmax.xlane.f32.xlu0 %v414
  %v416 = vpop.xlane.xlu0 %415
  %v417 = vsel %vm398, %v393, -inf
  %418 = vmax.xlane.f32.xlu0 %v417
  %v419 = vpop.xlane.xlu0 %418
  %v420 = vsub.f32 %v386, %v397
  %v421 = vsub.f32 %v387, %v401
  %v422 = vsub.f32 %v388, %v404
  %v423 = vsub.f32 %v389, %v407
  %v424 = vsub.f32 %v390, %v410
  %v425 = vsub.f32 %v391, %v413
  %v426 = vsub.f32 %v392, %v416
  %v427 = vsub.f32 %v393, %v419
  %v428 = vmul.f32 %v420, 1.442695
  %v429 = vpow.pop %v428
  %v430 = vmul.f32 %v421, 1.442695
  %v431 = vpow.pop %v430
  %v432 = vmul.f32 %v422, 1.442695
  %v433 = vpow.pop %v432
  %v434 = vmul.f32 %v423, 1.442695
  %v435 = vpow.pop %v434
  %v436 = vmul.f32 %v424, 1.442695
  %v437 = vpow.pop %v436
  %v438 = vmul.f32 %v425, 1.442695
  %v439 = vpow.pop %v438
  %v440 = vmul.f32 %v426, 1.442695
  %v441 = vpow.pop %v440
  %v442 = vmul.f32 %v427, 1.442695
  %v443 = vpow.pop %v442
  %v444 = vsel %vm394, %v429, 0.0
  %445 = vadd.xlane.f32.xlu0 %v444
  %v446 = vpop.xlane.xlu0 %445
  %v447 = vsel %vm398, %v431, 0.0
  %448 = vadd.xlane.f32.xlu0 %v447
  %v449 = vpop.xlane.xlu0 %448
  %v450 = vsel %vm394, %v433, 0.0
  %451 = vadd.xlane.f32.xlu0 %v450
  %v452 = vpop.xlane.xlu0 %451
  %v453 = vsel %vm398, %v435, 0.0
  %454 = vadd.xlane.f32.xlu0 %v453
  %v455 = vpop.xlane.xlu0 %454
  %v456 = vsel %vm394, %v437, 0.0
  %457 = vadd.xlane.f32.xlu0 %v456
  %v458 = vpop.xlane.xlu0 %457
  %v459 = vsel %vm398, %v439, 0.0
  %460 = vadd.xlane.f32.xlu0 %v459
  %v461 = vpop.xlane.xlu0 %460
  %v462 = vsel %vm394, %v441, 0.0
  %463 = vadd.xlane.f32.xlu0 %v462
  %v464 = vpop.xlane.xlu0 %463
  %v465 = vsel %vm398, %v443, 0.0
  %466 = vadd.xlane.f32.xlu0 %v465
  %v467 = vpop.xlane.xlu0 %466
  %v468 = vrcp.pop %v446
  %v469 = vmul.f32 %v446, %v468
  %v470 = vsub.f32 1.0, %v469
  %v471 = vmul.f32 %v468, %v470
  %v472 = vadd.f32 %v468, %v471
  %vm473 = vweird.f32 %v446
  %vm474 = vweird.f32 %v468
  %vm475 = vmor %vm473, %vm474
  %v476 = vsel %vm475, %v468, %v472
  %v477 = vand.u32 2147483647, %v446
  %vm478 = vcmp.eq.f32.partialorder %v477, 8.507059e+37
  %v479 = vand.u32 %v446, 2147483648
  %v480 = vor.u32 1.1754944e-38, %v479
  %v481 = vsel %vm478, %v480, %v476
  %v482 = vmul.f32 %v429, %v481
  %v483 = vrcp.pop %v449
  %v484 = vmul.f32 %v449, %v483
  %v485 = vsub.f32 1.0, %v484
  %v486 = vmul.f32 %v483, %v485
  %v487 = vadd.f32 %v483, %v486
  %vm488 = vweird.f32 %v449
  %vm489 = vweird.f32 %v483
  %vm490 = vmor %vm488, %vm489
  %v491 = vsel %vm490, %v483, %v487
  %v492 = vand.u32 2147483647, %v449
  %vm493 = vcmp.eq.f32.partialorder %v492, 8.507059e+37
  %v494 = vand.u32 %v449, 2147483648
  %v495 = vor.u32 1.1754944e-38, %v494
  %v496 = vsel %vm493, %v495, %v491
  %v497 = vmul.f32 %v431, %v496
  %v498 = vrcp.pop %v452
  %v499 = vmul.f32 %v452, %v498
  %v500 = vsub.f32 1.0, %v499
  %v501 = vmul.f32 %v498, %v500
  %v502 = vadd.f32 %v498, %v501
  %vm503 = vweird.f32 %v452
  %vm504 = vweird.f32 %v498
  %vm505 = vmor %vm503, %vm504
  %v506 = vsel %vm505, %v498, %v502
  %v507 = vand.u32 2147483647, %v452
  %vm508 = vcmp.eq.f32.partialorder %v507, 8.507059e+37
  %v509 = vand.u32 %v452, 2147483648
  %v510 = vor.u32 1.1754944e-38, %v509
  %v511 = vsel %vm508, %v510, %v506
  %v512 = vmul.f32 %v433, %v511
  %v513 = vrcp.pop %v455
  %v514 = vmul.f32 %v455, %v513
  %v515 = vsub.f32 1.0, %v514
  %v516 = vmul.f32 %v513, %v515
  %v517 = vadd.f32 %v513, %v516
  %vm518 = vweird.f32 %v455
  %vm519 = vweird.f32 %v513
  %vm520 = vmor %vm518, %vm519
  %v521 = vsel %vm520, %v513, %v517
  %v522 = vand.u32 2147483647, %v455
  %vm523 = vcmp.eq.f32.partialorder %v522, 8.507059e+37
  %v524 = vand.u32 %v455, 2147483648
  %v525 = vor.u32 1.1754944e-38, %v524
  %v526 = vsel %vm523, %v525, %v521
  %v527 = vmul.f32 %v435, %v526
  %v528 = vrcp.pop %v458
  %v529 = vmul.f32 %v458, %v528
  %v530 = vsub.f32 1.0, %v529
  %v531 = vmul.f32 %v528, %v530
  %v532 = vadd.f32 %v528, %v531
  %vm533 = vweird.f32 %v458
  %vm534 = vweird.f32 %v528
  %vm535 = vmor %vm533, %vm534
  %v536 = vsel %vm535, %v528, %v532
  %v537 = vand.u32 2147483647, %v458
  %vm538 = vcmp.eq.f32.partialorder %v537, 8.507059e+37
  %v539 = vand.u32 %v458, 2147483648
  %v540 = vor.u32 1.1754944e-38, %v539
  %v541 = vsel %vm538, %v540, %v536
  %v542 = vmul.f32 %v437, %v541
  %v543 = vrcp.pop %v461
  %v544 = vmul.f32 %v461, %v543
  %v545 = vsub.f32 1.0, %v544
  %v546 = vmul.f32 %v543, %v545
  %v547 = vadd.f32 %v543, %v546
  %vm548 = vweird.f32 %v461
  %vm549 = vweird.f32 %v543
  %vm550 = vmor %vm548, %vm549
  %v551 = vsel %vm550, %v543, %v547
  %v552 = vand.u32 2147483647, %v461
  %vm553 = vcmp.eq.f32.partialorder %v552, 8.507059e+37
  %v554 = vand.u32 %v461, 2147483648
  %v555 = vor.u32 1.1754944e-38, %v554
  %v556 = vsel %vm553, %v555, %v551
  %v557 = vmul.f32 %v439, %v556
  %v558 = vrcp.pop %v464
  %v559 = vmul.f32 %v464, %v558
  %v560 = vsub.f32 1.0, %v559
  %v561 = vmul.f32 %v558, %v560
  %v562 = vadd.f32 %v558, %v561
  %vm563 = vweird.f32 %v464
  %vm564 = vweird.f32 %v558
  %vm565 = vmor %vm563, %vm564
  %v566 = vsel %vm565, %v558, %v562
  %v567 = vand.u32 2147483647, %v464
  %vm568 = vcmp.eq.f32.partialorder %v567, 8.507059e+37
  %v569 = vand.u32 %v464, 2147483648
  %v570 = vor.u32 1.1754944e-38, %v569
  %v571 = vsel %vm568, %v570, %v566
  %v572 = vmul.f32 %v441, %v571
  %v573 = vrcp.pop %v467
  %v574 = vmul.f32 %v467, %v573
  %v575 = vsub.f32 1.0, %v574
  %v576 = vmul.f32 %v573, %v575
  %v577 = vadd.f32 %v573, %v576
  %vm578 = vweird.f32 %v467
  %vm579 = vweird.f32 %v573
  %vm580 = vmor %vm578, %vm579
  %v581 = vsel %vm580, %v573, %v577
  %v582 = vand.u32 2147483647, %v467
  %vm583 = vcmp.eq.f32.partialorder %v582, 8.507059e+37
  %v584 = vand.u32 %v467, 2147483648
  %v585 = vor.u32 1.1754944e-38, %v584
  %v586 = vsel %vm583, %v585, %v581
  %v587 = vmul.f32 %v443, %v586
  %588 = vrot.lane.b32.xlu0 %v226, 64
  %v589 = vpop.permute.xlu0 %588
  %590 = vrot.lane.b32.xlu0 %v229, 64
  %v591 = vpop.permute.xlu0 %590
  %v594 = vsel %vm394, %v482, 0
  %v597 = vsel %vm394, %v497, 0
  %vm599 = vcmask 1041408
  %v600 = vsel %vm599, %v591, 0
  %602 = vmatpush.msra.mxu0 0.0
  %603 = vmatpush.msra.mxu0 0.0
  %604 = vmatpush.msra.mxu0 0.0
  %605 = vmatpush.msra.mxu0 0.0
  %606 = vmatpush.msra.mxu0 0.0
  %607 = vmatpush.msra.mxu0 0.0
  %608 = vmatpush.msra.mxu0 0.0
  %609 = vmatpush.msra.mxu0 0.0
  %610 = vmatpush.msra.mxu0 0.0
  %611 = vmatpush.msra.mxu0 0.0
  %612 = vmatpush.msra.mxu0 0.0
  %613 = vmatpush.msra.mxu0 0.0
  %614 = vmatpush.msra.mxu0 0.0
  %615 = vmatpush.msra.mxu0 0.0
  %616 = vmatpush.msra.mxu0 %v600
  %617 = vmatpush.msra.mxu0 %v589
  %618 = vmatmul.f32.gmra.mxu0 %v594
  %v619 = vpop.f32.mrf.mxu0
  %v620 = vadd.f32 0.0, %v619
  %621 = vmatmul.f32.gmra.mxu0 %v597
  %v622 = vpop.f32.mrf.mxu0
  %v623 = vadd.f32 0.0, %v622
  %624 = vdwg.mxu0
  %625 = vrot.lane.b32.xlu0 %v226, 56
  %v626 = vpop.permute.xlu0 %625
  %627 = vrot.lane.b32.xlu0 %v229, 56
  %v628 = vpop.permute.xlu0 %627
  %v631 = vsel %vm394, %v512, 0
  %v634 = vsel %vm394, %v527, 0
  %v636 = vsel %vm599, %v628, 0
  %638 = vmatpush.msra.mxu0 0.0
  %639 = vmatpush.msra.mxu0 0.0
  %640 = vmatpush.msra.mxu0 0.0
  %641 = vmatpush.msra.mxu0 0.0
  %642 = vmatpush.msra.mxu0 0.0
  %643 = vmatpush.msra.mxu0 0.0
  %644 = vmatpush.msra.mxu0 0.0
  %645 = vmatpush.msra.mxu0 0.0
  %646 = vmatpush.msra.mxu0 0.0
  %647 = vmatpush.msra.mxu0 0.0
  %648 = vmatpush.msra.mxu0 0.0
  %649 = vmatpush.msra.mxu0 0.0
  %650 = vmatpush.msra.mxu0 0.0
  %651 = vmatpush.msra.mxu0 0.0
  %652 = vmatpush.msra.mxu0 %v636
  %653 = vmatpush.msra.mxu0 %v626
  %654 = vmatmul.f32.gmra.mxu0 %v631
  %v655 = vpop.f32.mrf.mxu0
  %v656 = vadd.f32 0.0, %v655
  %657 = vmatmul.f32.gmra.mxu0 %v634
  %v658 = vpop.f32.mrf.mxu0
  %v659 = vadd.f32 0.0, %v658
  %660 = vdwg.mxu0
  %661 = vrot.lane.b32.xlu0 %v226, 48
  %v662 = vpop.permute.xlu0 %661
  %663 = vrot.lane.b32.xlu0 %v229, 48
  %v664 = vpop.permute.xlu0 %663
  %v667 = vsel %vm394, %v542, 0
  %v670 = vsel %vm394, %v557, 0
  %v672 = vsel %vm599, %v664, 0
  %674 = vmatpush.msra.mxu0 0.0
  %675 = vmatpush.msra.mxu0 0.0
  %676 = vmatpush.msra.mxu0 0.0
  %677 = vmatpush.msra.mxu0 0.0
  %678 = vmatpush.msra.mxu0 0.0
  %679 = vmatpush.msra.mxu0 0.0
  %680 = vmatpush.msra.mxu0 0.0
  %681 = vmatpush.msra.mxu0 0.0
  %682 = vmatpush.msra.mxu0 0.0
  %683 = vmatpush.msra.mxu0 0.0
  %684 = vmatpush.msra.mxu0 0.0
  %685 = vmatpush.msra.mxu0 0.0
  %686 = vmatpush.msra.mxu0 0.0
  %687 = vmatpush.msra.mxu0 0.0
  %688 = vmatpush.msra.mxu0 %v672
  %689 = vmatpush.msra.mxu0 %v662
  %690 = vmatmul.f32.gmra.mxu0 %v667
  %v691 = vpop.f32.mrf.mxu0
  %v692 = vadd.f32 0.0, %v691
  %693 = vmatmul.f32.gmra.mxu0 %v670
  %v694 = vpop.f32.mrf.mxu0
  %v695 = vadd.f32 0.0, %v694
  %696 = vdwg.mxu0
  %697 = vrot.lane.b32.xlu0 %v226, 40
  %v698 = vpop.permute.xlu0 %697
  %699 = vrot.lane.b32.xlu0 %v229, 40
  %v700 = vpop.permute.xlu0 %699
  %v703 = vsel %vm394, %v572, 0
  %v706 = vsel %vm394, %v587, 0
  %v708 = vsel %vm599, %v700, 0
  %710 = vmatpush.msra.mxu0 0.0
  %711 = vmatpush.msra.mxu0 0.0
  %712 = vmatpush.msra.mxu0 0.0
  %713 = vmatpush.msra.mxu0 0.0
  %714 = vmatpush.msra.mxu0 0.0
  %715 = vmatpush.msra.mxu0 0.0
  %716 = vmatpush.msra.mxu0 0.0
  %717 = vmatpush.msra.mxu0 0.0
  %718 = vmatpush.msra.mxu0 0.0
  %719 = vmatpush.msra.mxu0 0.0
  %720 = vmatpush.msra.mxu0 0.0
  %721 = vmatpush.msra.mxu0 0.0
  %722 = vmatpush.msra.mxu0 0.0
  %723 = vmatpush.msra.mxu0 0.0
  %724 = vmatpush.msra.mxu0 %v708
  %725 = vmatpush.msra.mxu0 %v698
  %726 = vmatmul.f32.gmra.mxu0 %v703
  %v727 = vpop.f32.mrf.mxu0
  %v728 = vadd.f32 0.0, %v727
  %729 = vmatmul.f32.gmra.mxu0 %v706
  %v730 = vpop.f32.mrf.mxu0
  %v731 = vadd.f32 0.0, %v730
  %732 = vdwg.mxu0
  %735 = vrot.lane.b32.xlu0 %v656, 8
  %v736 = vpop.permute.xlu0 %735
  %737 = vrot.lane.b32.xlu0 %v659, 8
  %v738 = vpop.permute.xlu0 %737
  %743 = vrot.lane.b32.xlu0 %v692, 16
  %v744 = vpop.permute.xlu0 %743
  %745 = vrot.lane.b32.xlu0 %v695, 16
  %v746 = vpop.permute.xlu0 %745
  %751 = vrot.lane.b32.xlu0 %v728, 24
  %v752 = vpop.permute.xlu0 %751
  %753 = vrot.lane.b32.xlu0 %v731, 24
  %v754 = vpop.permute.xlu0 %753
  %v757 = vsel %vm237, %v620, %v736
  %v758 = vsel %vm237, %v623, %v738
  %vm759 = vcmask 130048
  %v760 = vsel %vm759, %v757, %v744
  %v761 = vsel %vm759, %v758, %v746
  %vm762 = vcmask 195584
  %v763 = vsel %vm762, %v760, %v752
  %v764 = vsel %vm762, %v761, %v754
  %769 = vrot.lane.b32.xlu0 %v120, 32
  %v770 = vpop.permute.xlu0 %769
  %771 = vrot.lane.b32.xlu0 %v121, 32
  %v772 = vpop.permute.xlu0 %771
  %773 = vrot.lane.b32.xlu0 %v122, 32
  %v774 = vpop.permute.xlu0 %773
  %775 = vrot.lane.b32.xlu0 %v123, 32
  %v776 = vpop.permute.xlu0 %775
  %782 = vrot.lane.b32.xlu0 %v201, 32
  %v783 = vpop.permute.xlu0 %782
  %v786 = vsel %vm139, %v763, 0
  %v789 = vsel %vm139, %v764, 0
  %791 = vmatpush.msra.mxu0 0.0
  %792 = vmatpush.msra.mxu0 0.0
  %793 = vmatpush.msra.mxu0 0.0
  %794 = vmatpush.msra.mxu0 0.0
  %795 = vmatpush.msra.mxu0 0.0
  %796 = vmatpush.msra.mxu0 0.0
  %797 = vmatpush.msra.mxu0 0.0
  %798 = vmatpush.msra.mxu0 0.0
  %799 = vmatpush.msra.mxu0 0.0
  %800 = vmatpush.msra.mxu0 0.0
  %801 = vmatpush.msra.mxu0 0.0
  %802 = vmatpush.msra.mxu0 0.0
  %803 = vmatpush.msra.mxu0 %v776
  %804 = vmatpush.msra.mxu0 %v774
  %805 = vmatpush.msra.mxu0 %v772
  %806 = vmatpush.msra.mxu0 %v770
  %807 = vmatmul.f32.gmra.mxu0 %v786
  %v808 = vpop.f32.mrf.mxu0
  %v809 = vadd.f32 %v783, %v808
  %810 = vmatmul.f32.gmra.mxu0 %v789
  %v811 = vpop.f32.mrf.mxu0
  %v812 = vadd.f32 %v783, %v811
  %813 = vdwg.mxu0
  %v814 = vadd.f32 %v119, %v809
  %v815 = vadd.f32 %v112, %v812
  %v816 = vsel %vm139, %v814, 0.0
  %817 = vadd.xlane.f32.xlu0 %v816
  %v818 = vpop.xlane.xlu0 %817
  %v819 = vsel %vm143, %v815, 0.0
  %820 = vadd.xlane.f32.xlu0 %v819
  %v821 = vpop.xlane.xlu0 %820
  %v822 = vmul.f32 %v818, %v153
  %v823 = vmul.f32 %v821, %v153
  %v824 = vsub.f32 %v814, %v822
  %v825 = vsub.f32 %v815, %v823
  %v826 = vmul.f32 %v824, %v824
  %v827 = vmul.f32 %v825, %v825
  %v828 = vsel %vm139, %v826, 0.0
  %829 = vadd.xlane.f32.xlu0 %v828
  %v830 = vpop.xlane.xlu0 %829
  %v831 = vsel %vm143, %v827, 0.0
  %832 = vadd.xlane.f32.xlu0 %v831
  %v833 = vpop.xlane.xlu0 %832
  %v834 = vmul.f32 %v830, %v153
  %v835 = vmul.f32 %v833, %v153
  %v836 = vadd.f32 %v834, 1e-12
  %v837 = vadd.f32 %v835, 1e-12
  %v838 = vrsqrt.pop %v836
  %v839 = vmul.f32 %v838, %v836
  %v840 = vmul.f32 %v839, %v838
  %v841 = vmul.f32 0.5, %v840
  %v842 = vsub.f32 1.5, %v841
  %v843 = vmul.f32 %v838, %v842
  %vm844 = vweird.f32 %v836
  %vm845 = vweird.f32 %v838
  %vm846 = vmor %vm844, %vm845
  %v847 = vsel %vm846, %v838, %v843
  %v848 = vrsqrt.pop %v837
  %v849 = vmul.f32 %v848, %v837
  %v850 = vmul.f32 %v849, %v848
  %v851 = vmul.f32 0.5, %v850
  %v852 = vsub.f32 1.5, %v851
  %v853 = vmul.f32 %v848, %v852
  %vm854 = vweird.f32 %v837
  %vm855 = vweird.f32 %v848
  %vm856 = vmor %vm854, %vm855
  %v857 = vsel %vm856, %v848, %v853
  %v858 = vmul.f32 %v824, %v847
  %v859 = vmul.f32 %v825, %v857
  %860 = vrot.lane.b32.xlu0 %v192, 64
  %v861 = vpop.permute.xlu0 %860
  %v863 = vmul.f32 %v858, %v861
  %v864 = vmul.f32 %v859, %v861
  %865 = vrot.lane.b32.xlu0 %v192, 32
  %v866 = vpop.permute.xlu0 %865
  %v868 = vadd.f32 %v863, %v866
  %v869 = vadd.f32 %v864, %v866
  %v870 = vperm.slane %v138, 0
  %v872 = vsel %vm139, %v868, 0
  %v875 = vsel %vm139, %v869, 0
  %877 = vmatpush.msra.mxu0 0.0
  %878 = vmatpush.msra.mxu0 0.0
  %879 = vmatpush.msra.mxu0 0.0
  %880 = vmatpush.msra.mxu0 0.0
  %881 = vmatpush.msra.mxu0 0.0
  %882 = vmatpush.msra.mxu0 0.0
  %883 = vmatpush.msra.mxu0 0.0
  %884 = vmatpush.msra.mxu0 0.0
  %885 = vmatpush.msra.mxu0 0.0
  %886 = vmatpush.msra.mxu0 0.0
  %887 = vmatpush.msra.mxu0 0.0
  %888 = vmatpush.msra.mxu0 0.0
  %889 = vmatpush.msra.mxu0 %v127
  %890 = vmatpush.msra.mxu0 %v126
  %891 = vmatpush.msra.mxu0 %v125
  %892 = vmatpush.msra.mxu0 %v124
  %893 = vmatmul.f32.gmra.mxu0 %v872
  %v894 = vpop.f32.mrf.mxu0
  %v895 = vadd.f32 %v870, %v894
  %896 = vmatmul.f32.gmra.mxu0 %v875
  %v897 = vpop.f32.mrf.mxu0
  %v898 = vadd.f32 %v870, %v897
  %899 = vdwg.mxu0
  %v900 = vmul.f32 %v895, 0.5
  %v901 = vmul.f32 %v898, 0.5
  %v902 = vmul.f32 %v895, 0.70710677
  %v903 = vmul.f32 %v898, 0.70710677
  %v904 = vmul.f32 %v902, %v902
  %v905 = vmin.f32 16.0, %v904
  %v906 = vmul.f32 %v905, 2.1237322e-06
  %v907 = vadd.f32 %v906, 0.00028619796
  %v908 = vmul.f32 %v905, %v907
  %v909 = vadd.f32 %v908, 0.0036580483
  %v910 = vmul.f32 %v905, %v909
  %v911 = vadd.f32 %v910, 0.05243302
  %v912 = vmul.f32 %v905, %v911
  %v913 = vadd.f32 %v912, 0.18741608
  %v914 = vmul.f32 %v905, %v913
  %v915 = vadd.f32 %v914, 1.1283791
  %v916 = vmul.f32 %v902, %v915
  %v917 = vmul.f32 %v905, 3.8918573e-05
  %v918 = vadd.f32 %v917, 0.001143296
  %v919 = vmul.f32 %v905, %v918
  %v920 = vadd.f32 %v919, 0.014752088
  %v921 = vmul.f32 %v905, %v920
  %v922 = vadd.f32 %v921, 0.112945676
  %v923 = vmul.f32 %v905, %v922
  %v924 = vadd.f32 %v923, 0.4994258
  %v925 = vmul.f32 %v905, %v924
  %v926 = vadd.f32 %v925, 1.0
  %v927 = vrcp.pop %v926
  %v928 = vmul.f32 %v926, %v927
  %v929 = vsub.f32 1.0, %v928
  %v930 = vmul.f32 %v927, %v929
  %v931 = vadd.f32 %v927, %v930
  %vm932 = vweird.f32 %v926
  %vm933 = vweird.f32 %v927
  %vm934 = vmor %vm932, %vm933
  %v935 = vsel %vm934, %v927, %v931
  %v936 = vand.u32 2147483647, %v926
  %vm937 = vcmp.eq.f32.partialorder %v936, 8.507059e+37
  %v938 = vand.u32 %v926, 2147483648
  %v939 = vor.u32 1.1754944e-38, %v938
  %v940 = vsel %vm937, %v939, %v935
  %v941 = vmul.f32 %v916, %v940
  %v942 = vmin.f32 %v941, 1.0
  %v943 = vmax.f32 %v942, -1.0
  %v944 = vmul.f32 %v903, %v903
  %v945 = vmin.f32 16.0, %v944
  %v946 = vmul.f32 %v945, 2.1237322e-06
  %v947 = vadd.f32 %v946, 0.00028619796
  %v948 = vmul.f32 %v945, %v947
  %v949 = vadd.f32 %v948, 0.0036580483
  %v950 = vmul.f32 %v945, %v949
  %v951 = vadd.f32 %v950, 0.05243302
  %v952 = vmul.f32 %v945, %v951
  %v953 = vadd.f32 %v952, 0.18741608
  %v954 = vmul.f32 %v945, %v953
  %v955 = vadd.f32 %v954, 1.1283791
  %v956 = vmul.f32 %v903, %v955
  %v957 = vmul.f32 %v945, 3.8918573e-05
  %v958 = vadd.f32 %v957, 0.001143296
  %v959 = vmul.f32 %v945, %v958
  %v960 = vadd.f32 %v959, 0.014752088
  %v961 = vmul.f32 %v945, %v960
  %v962 = vadd.f32 %v961, 0.112945676
  %v963 = vmul.f32 %v945, %v962
  %v964 = vadd.f32 %v963, 0.4994258
  %v965 = vmul.f32 %v945, %v964
  %v966 = vadd.f32 %v965, 1.0
  %v967 = vrcp.pop %v966
  %v968 = vmul.f32 %v966, %v967
  %v969 = vsub.f32 1.0, %v968
  %v970 = vmul.f32 %v967, %v969
  %v971 = vadd.f32 %v967, %v970
  %vm972 = vweird.f32 %v966
  %vm973 = vweird.f32 %v967
  %vm974 = vmor %vm972, %vm973
  %v975 = vsel %vm974, %v967, %v971
  %v976 = vand.u32 2147483647, %v966
  %vm977 = vcmp.eq.f32.partialorder %v976, 8.507059e+37
  %v978 = vand.u32 %v966, 2147483648
  %v979 = vor.u32 1.1754944e-38, %v978
  %v980 = vsel %vm977, %v979, %v975
  %v981 = vmul.f32 %v956, %v980
  %v982 = vmin.f32 %v981, 1.0
  %v983 = vmax.f32 %v982, -1.0
  %v984 = vadd.f32 %v943, 1.0
  %v985 = vadd.f32 %v983, 1.0
  %v986 = vmul.f32 %v900, %v984
  %v987 = vmul.f32 %v901, %v985
  %v989 = vsel %vm53, %v986, 0
  %v992 = vsel %vm53, %v987, 0
  %994 = vmatpush.msra.mxu0 0.0
  %995 = vmatpush.msra.mxu0 0.0
  %996 = vmatpush.msra.mxu0 0.0
  %997 = vmatpush.msra.mxu0 0.0
  %998 = vmatpush.msra.mxu0 0.0
  %999 = vmatpush.msra.mxu0 0.0
  %1000 = vmatpush.msra.mxu0 0.0
  %1001 = vmatpush.msra.mxu0 0.0
  %1002 = vmatpush.msra.mxu0 %v135
  %1003 = vmatpush.msra.mxu0 %v134
  %1004 = vmatpush.msra.mxu0 %v133
  %1005 = vmatpush.msra.mxu0 %v132
  %1006 = vmatpush.msra.mxu0 %v131
  %1007 = vmatpush.msra.mxu0 %v130
  %1008 = vmatpush.msra.mxu0 %v129
  %1009 = vmatpush.msra.mxu0 %v128
  %1010 = vmatmul.f32.gmra.mxu0 %v989
  %v1011 = vpop.f32.mrf.mxu0
  %v1012 = vadd.f32 0.0, %v1011
  %1013 = vmatmul.f32.gmra.mxu0 %v992
  %v1014 = vpop.f32.mrf.mxu0
  %v1015 = vadd.f32 0.0, %v1014
  %1016 = vdwg.mxu0
  %v1017 = vadd.f32 %v814, %v1012
  %v1018 = vadd.f32 %v815, %v1015
  %1020 = vrot.lane.b32.xlu0 %v870, 64
  %v1021 = vpop.permute.xlu0 %1020
  %v1023 = vadd.f32 %v1017, %v1021
  %v1024 = vadd.f32 %v1018, %v1021
  %s1025 = scalar_lea.vmem %s2, 136
  %v1026 = vld [vmem:[%s1025] sm:$0xff]
  %v1027 = vld [vmem:[%s1025 + $0x8] sm:$0xff]
  %v1028 = vld [vmem:[%s1025 + $0x10] sm:$0xff]
  %v1029 = vld [vmem:[%s1025 + $0x18] sm:$0xff]
  %v1030 = vld [vmem:[%s1025 + $0x20] sm:$0xff]
  %v1031 = vld [vmem:[%s1025 + $0x28] sm:$0xff]
  %v1032 = vld [vmem:[%s1025 + $0x30] sm:$0xff]
  %v1033 = vld [vmem:[%s1025 + $0x38] sm:$0xff]
  %v1034 = vld [vmem:[%s1025 + $0x40] sm:$0xff]
  %v1035 = vld [vmem:[%s1025 + $0x48] sm:$0xff]
  %v1036 = vld [vmem:[%s1025 + $0x50] sm:$0xff]
  %v1037 = vld [vmem:[%s1025 + $0x58] sm:$0xff]
  %v1038 = vld [vmem:[%s1025 + $0x60] sm:$0xff]
  %v1039 = vld [vmem:[%s1025 + $0x68] sm:$0xff]
  %v1040 = vld [vmem:[%s1025 + $0x70] sm:$0xff]
  %v1041 = vld [vmem:[%s1025 + $0x78] sm:$0xff]
  %v1042 = vld [vmem:[%s1025 + $0x80] sm:$0x1]
  %v1043 = vld [vmem:[%s1025 + $0x81] sm:$0x1]
  %v1044 = vld [vmem:[%s1025 + $0x82] sm:$0x1]
  %v1045 = vsel %vm139, %v1023, 0.0
  %1046 = vadd.xlane.f32.xlu0 %v1045
  %v1047 = vpop.xlane.xlu0 %1046
  %v1048 = vsel %vm143, %v1024, 0.0
  %1049 = vadd.xlane.f32.xlu0 %v1048
  %v1050 = vpop.xlane.xlu0 %1049
  %v1051 = vmul.f32 %v1047, %v153
  %v1052 = vmul.f32 %v1050, %v153
  %v1053 = vsub.f32 %v1023, %v1051
  %v1054 = vsub.f32 %v1024, %v1052
  %v1055 = vmul.f32 %v1053, %v1053
  %v1056 = vmul.f32 %v1054, %v1054
  %v1057 = vsel %vm139, %v1055, 0.0
  %1058 = vadd.xlane.f32.xlu0 %v1057
  %v1059 = vpop.xlane.xlu0 %1058
  %v1060 = vsel %vm143, %v1056, 0.0
  %1061 = vadd.xlane.f32.xlu0 %v1060
  %v1062 = vpop.xlane.xlu0 %1061
  %v1063 = vmul.f32 %v1059, %v153
  %v1064 = vmul.f32 %v1062, %v153
  %v1065 = vadd.f32 %v1063, 1e-12
  %v1066 = vadd.f32 %v1064, 1e-12
  %v1067 = vrsqrt.pop %v1065
  %v1068 = vmul.f32 %v1067, %v1065
  %v1069 = vmul.f32 %v1068, %v1067
  %v1070 = vmul.f32 0.5, %v1069
  %v1071 = vsub.f32 1.5, %v1070
  %v1072 = vmul.f32 %v1067, %v1071
  %vm1073 = vweird.f32 %v1065
  %vm1074 = vweird.f32 %v1067
  %vm1075 = vmor %vm1073, %vm1074
  %v1076 = vsel %vm1075, %v1067, %v1072
  %v1077 = vrsqrt.pop %v1066
  %v1078 = vmul.f32 %v1077, %v1066
  %v1079 = vmul.f32 %v1078, %v1077
  %v1080 = vmul.f32 0.5, %v1079
  %v1081 = vsub.f32 1.5, %v1080
  %v1082 = vmul.f32 %v1077, %v1081
  %vm1083 = vweird.f32 %v1066
  %vm1084 = vweird.f32 %v1077
  %vm1085 = vmor %vm1083, %vm1084
  %v1086 = vsel %vm1085, %v1077, %v1082
  %v1087 = vmul.f32 %v1053, %v1076
  %v1088 = vmul.f32 %v1054, %v1086
  %v1089 = vperm.slane %v1042, 0
  %v1090 = vmul.f32 %v1087, %v1089
  %v1091 = vmul.f32 %v1088, %v1089
  %1093 = vrot.lane.b32.xlu0 %v1089, 96
  %v1094 = vpop.permute.xlu0 %1093
  %v1096 = vadd.f32 %v1090, %v1094
  %v1097 = vadd.f32 %v1091, %v1094
  %v1098 = vperm.slane %v1043, 0
  %v1100 = vsel %vm139, %v1096, 0
  %v1103 = vsel %vm139, %v1097, 0
  %1105 = vmatpush.msra.mxu0 0.0
  %1106 = vmatpush.msra.mxu0 0.0
  %1107 = vmatpush.msra.mxu0 0.0
  %1108 = vmatpush.msra.mxu0 0.0
  %1109 = vmatpush.msra.mxu0 0.0
  %1110 = vmatpush.msra.mxu0 0.0
  %1111 = vmatpush.msra.mxu0 0.0
  %1112 = vmatpush.msra.mxu0 0.0
  %1113 = vmatpush.msra.mxu0 0.0
  %1114 = vmatpush.msra.mxu0 0.0
  %1115 = vmatpush.msra.mxu0 0.0
  %1116 = vmatpush.msra.mxu0 0.0
  %1117 = vmatpush.msra.mxu0 %v1029
  %1118 = vmatpush.msra.mxu0 %v1028
  %1119 = vmatpush.msra.mxu0 %v1027
  %1120 = vmatpush.msra.mxu0 %v1026
  %1121 = vmatmul.f32.gmra.mxu0 %v1100
  %v1122 = vpop.f32.mrf.mxu0
  %v1123 = vadd.f32 %v1098, %v1122
  %1124 = vmatmul.f32.gmra.mxu0 %v1103
  %v1125 = vpop.f32.mrf.mxu0
  %v1126 = vadd.f32 %v1098, %v1125
  %1127 = vdwg.mxu0
  %1130 = vrot.lane.b32.xlu0 %v1123, 96
  %v1131 = vpop.permute.xlu0 %1130
  %1132 = vrot.lane.b32.xlu0 %v1126, 96
  %v1133 = vpop.permute.xlu0 %1132
  %v1134 = vsel %vm237, %v1123, 0
  %v1136 = vsel %vm237, %v1126, 0
  %v1138 = vsel %vm237, %v1131, 0
  %v1140 = vsel %vm237, %v1133, 0
  %1142 = vmatpush.xpose.msra.mxu0 0.0
  %1143 = vmatpush.xpose.msra.mxu0 0.0
  %1144 = vmatpush.xpose.msra.mxu0 0.0
  %1145 = vmatpush.xpose.msra.mxu0 0.0
  %1146 = vmatpush.xpose.msra.mxu0 0.0
  %1147 = vmatpush.xpose.msra.mxu0 0.0
  %1148 = vmatpush.xpose.msra.mxu0 0.0
  %1149 = vmatpush.xpose.msra.mxu0 0.0
  %1150 = vmatpush.xpose.msra.mxu0 0.0
  %1151 = vmatpush.xpose.msra.mxu0 0.0
  %1152 = vmatpush.xpose.msra.mxu0 0.0
  %1153 = vmatpush.xpose.msra.mxu0 0.0
  %1154 = vmatpush.xpose.msra.mxu0 0.0
  %1155 = vmatpush.xpose.msra.mxu0 0.0
  %1156 = vmatpush.xpose.msra.mxu0 %v1140
  %1157 = vmatpush.xpose.msra.mxu0 %v1138
  %1158 = vmatmul.f32.gmra.mxu0 %v1134
  %v1159 = vpop.f32.mrf.mxu0
  %v1160 = vadd.f32 0.0, %v1159
  %1161 = vmatmul.f32.gmra.mxu0 %v1136
  %v1162 = vpop.f32.mrf.mxu0
  %v1163 = vadd.f32 0.0, %v1162
  %1164 = vdwg.mxu0
  %1165 = vrot.lane.b32.xlu0 %v1123, 120
  %v1166 = vpop.permute.xlu0 %1165
  %1167 = vrot.lane.b32.xlu0 %v1126, 120
  %v1168 = vpop.permute.xlu0 %1167
  %1169 = vrot.lane.b32.xlu0 %v1123, 88
  %v1170 = vpop.permute.xlu0 %1169
  %1171 = vrot.lane.b32.xlu0 %v1126, 88
  %v1172 = vpop.permute.xlu0 %1171
  %v1173 = vsel %vm237, %v1166, 0
  %v1175 = vsel %vm237, %v1168, 0
  %v1177 = vsel %vm237, %v1170, 0
  %v1179 = vsel %vm237, %v1172, 0
  %1181 = vmatpush.xpose.msra.mxu0 0.0
  %1182 = vmatpush.xpose.msra.mxu0 0.0
  %1183 = vmatpush.xpose.msra.mxu0 0.0
  %1184 = vmatpush.xpose.msra.mxu0 0.0
  %1185 = vmatpush.xpose.msra.mxu0 0.0
  %1186 = vmatpush.xpose.msra.mxu0 0.0
  %1187 = vmatpush.xpose.msra.mxu0 0.0
  %1188 = vmatpush.xpose.msra.mxu0 0.0
  %1189 = vmatpush.xpose.msra.mxu0 0.0
  %1190 = vmatpush.xpose.msra.mxu0 0.0
  %1191 = vmatpush.xpose.msra.mxu0 0.0
  %1192 = vmatpush.xpose.msra.mxu0 0.0
  %1193 = vmatpush.xpose.msra.mxu0 0.0
  %1194 = vmatpush.xpose.msra.mxu0 0.0
  %1195 = vmatpush.xpose.msra.mxu0 %v1179
  %1196 = vmatpush.xpose.msra.mxu0 %v1177
  %1197 = vmatmul.f32.gmra.mxu0 %v1173
  %v1198 = vpop.f32.mrf.mxu0
  %v1199 = vadd.f32 0.0, %v1198
  %1200 = vmatmul.f32.gmra.mxu0 %v1175
  %v1201 = vpop.f32.mrf.mxu0
  %v1202 = vadd.f32 0.0, %v1201
  %1203 = vdwg.mxu0
  %1204 = vrot.lane.b32.xlu0 %v1123, 112
  %v1205 = vpop.permute.xlu0 %1204
  %1206 = vrot.lane.b32.xlu0 %v1126, 112
  %v1207 = vpop.permute.xlu0 %1206
  %1208 = vrot.lane.b32.xlu0 %v1123, 80
  %v1209 = vpop.permute.xlu0 %1208
  %1210 = vrot.lane.b32.xlu0 %v1126, 80
  %v1211 = vpop.permute.xlu0 %1210
  %v1212 = vsel %vm237, %v1205, 0
  %v1214 = vsel %vm237, %v1207, 0
  %v1216 = vsel %vm237, %v1209, 0
  %v1218 = vsel %vm237, %v1211, 0
  %1220 = vmatpush.xpose.msra.mxu0 0.0
  %1221 = vmatpush.xpose.msra.mxu0 0.0
  %1222 = vmatpush.xpose.msra.mxu0 0.0
  %1223 = vmatpush.xpose.msra.mxu0 0.0
  %1224 = vmatpush.xpose.msra.mxu0 0.0
  %1225 = vmatpush.xpose.msra.mxu0 0.0
  %1226 = vmatpush.xpose.msra.mxu0 0.0
  %1227 = vmatpush.xpose.msra.mxu0 0.0
  %1228 = vmatpush.xpose.msra.mxu0 0.0
  %1229 = vmatpush.xpose.msra.mxu0 0.0
  %1230 = vmatpush.xpose.msra.mxu0 0.0
  %1231 = vmatpush.xpose.msra.mxu0 0.0
  %1232 = vmatpush.xpose.msra.mxu0 0.0
  %1233 = vmatpush.xpose.msra.mxu0 0.0
  %1234 = vmatpush.xpose.msra.mxu0 %v1218
  %1235 = vmatpush.xpose.msra.mxu0 %v1216
  %1236 = vmatmul.f32.gmra.mxu0 %v1212
  %v1237 = vpop.f32.mrf.mxu0
  %v1238 = vadd.f32 0.0, %v1237
  %1239 = vmatmul.f32.gmra.mxu0 %v1214
  %v1240 = vpop.f32.mrf.mxu0
  %v1241 = vadd.f32 0.0, %v1240
  %1242 = vdwg.mxu0
  %1243 = vrot.lane.b32.xlu0 %v1123, 104
  %v1244 = vpop.permute.xlu0 %1243
  %1245 = vrot.lane.b32.xlu0 %v1126, 104
  %v1246 = vpop.permute.xlu0 %1245
  %1247 = vrot.lane.b32.xlu0 %v1123, 72
  %v1248 = vpop.permute.xlu0 %1247
  %1249 = vrot.lane.b32.xlu0 %v1126, 72
  %v1250 = vpop.permute.xlu0 %1249
  %v1251 = vsel %vm237, %v1244, 0
  %v1253 = vsel %vm237, %v1246, 0
  %v1255 = vsel %vm237, %v1248, 0
  %v1257 = vsel %vm237, %v1250, 0
  %1259 = vmatpush.xpose.msra.mxu0 0.0
  %1260 = vmatpush.xpose.msra.mxu0 0.0
  %1261 = vmatpush.xpose.msra.mxu0 0.0
  %1262 = vmatpush.xpose.msra.mxu0 0.0
  %1263 = vmatpush.xpose.msra.mxu0 0.0
  %1264 = vmatpush.xpose.msra.mxu0 0.0
  %1265 = vmatpush.xpose.msra.mxu0 0.0
  %1266 = vmatpush.xpose.msra.mxu0 0.0
  %1267 = vmatpush.xpose.msra.mxu0 0.0
  %1268 = vmatpush.xpose.msra.mxu0 0.0
  %1269 = vmatpush.xpose.msra.mxu0 0.0
  %1270 = vmatpush.xpose.msra.mxu0 0.0
  %1271 = vmatpush.xpose.msra.mxu0 0.0
  %1272 = vmatpush.xpose.msra.mxu0 0.0
  %1273 = vmatpush.xpose.msra.mxu0 %v1257
  %1274 = vmatpush.xpose.msra.mxu0 %v1255
  %1275 = vmatmul.f32.gmra.mxu0 %v1251
  %v1276 = vpop.f32.mrf.mxu0
  %v1277 = vadd.f32 0.0, %v1276
  %1278 = vmatmul.f32.gmra.mxu0 %v1253
  %v1279 = vpop.f32.mrf.mxu0
  %v1280 = vadd.f32 0.0, %v1279
  %1281 = vdwg.mxu0
  %v1282 = vadd.f32 %v1160, %v48
  %v1283 = vadd.f32 %v1163, %v49
  %v1284 = vadd.f32 %v1199, %v48
  %v1285 = vadd.f32 %v1202, %v49
  %v1286 = vadd.f32 %v1238, %v48
  %v1287 = vadd.f32 %v1241, %v49
  %v1288 = vadd.f32 %v1277, %v48
  %v1289 = vadd.f32 %v1280, %v49
  %v1290 = vsel %vm394, %v1282, -inf
  %1291 = vmax.xlane.f32.xlu0 %v1290
  %v1292 = vpop.xlane.xlu0 %1291
  %v1293 = vsel %vm398, %v1283, -inf
  %1294 = vmax.xlane.f32.xlu0 %v1293
  %v1295 = vpop.xlane.xlu0 %1294
  %v1296 = vsel %vm394, %v1284, -inf
  %1297 = vmax.xlane.f32.xlu0 %v1296
  %v1298 = vpop.xlane.xlu0 %1297
  %v1299 = vsel %vm398, %v1285, -inf
  %1300 = vmax.xlane.f32.xlu0 %v1299
  %v1301 = vpop.xlane.xlu0 %1300
  %v1302 = vsel %vm394, %v1286, -inf
  %1303 = vmax.xlane.f32.xlu0 %v1302
  %v1304 = vpop.xlane.xlu0 %1303
  %v1305 = vsel %vm398, %v1287, -inf
  %1306 = vmax.xlane.f32.xlu0 %v1305
  %v1307 = vpop.xlane.xlu0 %1306
  %v1308 = vsel %vm394, %v1288, -inf
  %1309 = vmax.xlane.f32.xlu0 %v1308
  %v1310 = vpop.xlane.xlu0 %1309
  %v1311 = vsel %vm398, %v1289, -inf
  %1312 = vmax.xlane.f32.xlu0 %v1311
  %v1313 = vpop.xlane.xlu0 %1312
  %v1314 = vsub.f32 %v1282, %v1292
  %v1315 = vsub.f32 %v1283, %v1295
  %v1316 = vsub.f32 %v1284, %v1298
  %v1317 = vsub.f32 %v1285, %v1301
  %v1318 = vsub.f32 %v1286, %v1304
  %v1319 = vsub.f32 %v1287, %v1307
  %v1320 = vsub.f32 %v1288, %v1310
  %v1321 = vsub.f32 %v1289, %v1313
  %v1322 = vmul.f32 %v1314, 1.442695
  %v1323 = vpow.pop %v1322
  %v1324 = vmul.f32 %v1315, 1.442695
  %v1325 = vpow.pop %v1324
  %v1326 = vmul.f32 %v1316, 1.442695
  %v1327 = vpow.pop %v1326
  %v1328 = vmul.f32 %v1317, 1.442695
  %v1329 = vpow.pop %v1328
  %v1330 = vmul.f32 %v1318, 1.442695
  %v1331 = vpow.pop %v1330
  %v1332 = vmul.f32 %v1319, 1.442695
  %v1333 = vpow.pop %v1332
  %v1334 = vmul.f32 %v1320, 1.442695
  %v1335 = vpow.pop %v1334
  %v1336 = vmul.f32 %v1321, 1.442695
  %v1337 = vpow.pop %v1336
  %v1338 = vsel %vm394, %v1323, 0.0
  %1339 = vadd.xlane.f32.xlu0 %v1338
  %v1340 = vpop.xlane.xlu0 %1339
  %v1341 = vsel %vm398, %v1325, 0.0
  %1342 = vadd.xlane.f32.xlu0 %v1341
  %v1343 = vpop.xlane.xlu0 %1342
  %v1344 = vsel %vm394, %v1327, 0.0
  %1345 = vadd.xlane.f32.xlu0 %v1344
  %v1346 = vpop.xlane.xlu0 %1345
  %v1347 = vsel %vm398, %v1329, 0.0
  %1348 = vadd.xlane.f32.xlu0 %v1347
  %v1349 = vpop.xlane.xlu0 %1348
  %v1350 = vsel %vm394, %v1331, 0.0
  %1351 = vadd.xlane.f32.xlu0 %v1350
  %v1352 = vpop.xlane.xlu0 %1351
  %v1353 = vsel %vm398, %v1333, 0.0
  %1354 = vadd.xlane.f32.xlu0 %v1353
  %v1355 = vpop.xlane.xlu0 %1354
  %v1356 = vsel %vm394, %v1335, 0.0
  %1357 = vadd.xlane.f32.xlu0 %v1356
  %v1358 = vpop.xlane.xlu0 %1357
  %v1359 = vsel %vm398, %v1337, 0.0
  %1360 = vadd.xlane.f32.xlu0 %v1359
  %v1361 = vpop.xlane.xlu0 %1360
  %v1362 = vrcp.pop %v1340
  %v1363 = vmul.f32 %v1340, %v1362
  %v1364 = vsub.f32 1.0, %v1363
  %v1365 = vmul.f32 %v1362, %v1364
  %v1366 = vadd.f32 %v1362, %v1365
  %vm1367 = vweird.f32 %v1340
  %vm1368 = vweird.f32 %v1362
  %vm1369 = vmor %vm1367, %vm1368
  %v1370 = vsel %vm1369, %v1362, %v1366
  %v1371 = vand.u32 2147483647, %v1340
  %vm1372 = vcmp.eq.f32.partialorder %v1371, 8.507059e+37
  %v1373 = vand.u32 %v1340, 2147483648
  %v1374 = vor.u32 1.1754944e-38, %v1373
  %v1375 = vsel %vm1372, %v1374, %v1370
  %v1376 = vmul.f32 %v1323, %v1375
  %v1377 = vrcp.pop %v1343
  %v1378 = vmul.f32 %v1343, %v1377
  %v1379 = vsub.f32 1.0, %v1378
  %v1380 = vmul.f32 %v1377, %v1379
  %v1381 = vadd.f32 %v1377, %v1380
  %vm1382 = vweird.f32 %v1343
  %vm1383 = vweird.f32 %v1377
  %vm1384 = vmor %vm1382, %vm1383
  %v1385 = vsel %vm1384, %v1377, %v1381
  %v1386 = vand.u32 2147483647, %v1343
  %vm1387 = vcmp.eq.f32.partialorder %v1386, 8.507059e+37
  %v1388 = vand.u32 %v1343, 2147483648
  %v1389 = vor.u32 1.1754944e-38, %v1388
  %v1390 = vsel %vm1387, %v1389, %v1385
  %v1391 = vmul.f32 %v1325, %v1390
  %v1392 = vrcp.pop %v1346
  %v1393 = vmul.f32 %v1346, %v1392
  %v1394 = vsub.f32 1.0, %v1393
  %v1395 = vmul.f32 %v1392, %v1394
  %v1396 = vadd.f32 %v1392, %v1395
  %vm1397 = vweird.f32 %v1346
  %vm1398 = vweird.f32 %v1392
  %vm1399 = vmor %vm1397, %vm1398
  %v1400 = vsel %vm1399, %v1392, %v1396
  %v1401 = vand.u32 2147483647, %v1346
  %vm1402 = vcmp.eq.f32.partialorder %v1401, 8.507059e+37
  %v1403 = vand.u32 %v1346, 2147483648
  %v1404 = vor.u32 1.1754944e-38, %v1403
  %v1405 = vsel %vm1402, %v1404, %v1400
  %v1406 = vmul.f32 %v1327, %v1405
  %v1407 = vrcp.pop %v1349
  %v1408 = vmul.f32 %v1349, %v1407
  %v1409 = vsub.f32 1.0, %v1408
  %v1410 = vmul.f32 %v1407, %v1409
  %v1411 = vadd.f32 %v1407, %v1410
  %vm1412 = vweird.f32 %v1349
  %vm1413 = vweird.f32 %v1407
  %vm1414 = vmor %vm1412, %vm1413
  %v1415 = vsel %vm1414, %v1407, %v1411
  %v1416 = vand.u32 2147483647, %v1349
  %vm1417 = vcmp.eq.f32.partialorder %v1416, 8.507059e+37
  %v1418 = vand.u32 %v1349, 2147483648
  %v1419 = vor.u32 1.1754944e-38, %v1418
  %v1420 = vsel %vm1417, %v1419, %v1415
  %v1421 = vmul.f32 %v1329, %v1420
  %v1422 = vrcp.pop %v1352
  %v1423 = vmul.f32 %v1352, %v1422
  %v1424 = vsub.f32 1.0, %v1423
  %v1425 = vmul.f32 %v1422, %v1424
  %v1426 = vadd.f32 %v1422, %v1425
  %vm1427 = vweird.f32 %v1352
  %vm1428 = vweird.f32 %v1422
  %vm1429 = vmor %vm1427, %vm1428
  %v1430 = vsel %vm1429, %v1422, %v1426
  %v1431 = vand.u32 2147483647, %v1352
  %vm1432 = vcmp.eq.f32.partialorder %v1431, 8.507059e+37
  %v1433 = vand.u32 %v1352, 2147483648
  %v1434 = vor.u32 1.1754944e-38, %v1433
  %v1435 = vsel %vm1432, %v1434, %v1430
  %v1436 = vmul.f32 %v1331, %v1435
  %v1437 = vrcp.pop %v1355
  %v1438 = vmul.f32 %v1355, %v1437
  %v1439 = vsub.f32 1.0, %v1438
  %v1440 = vmul.f32 %v1437, %v1439
  %v1441 = vadd.f32 %v1437, %v1440
  %vm1442 = vweird.f32 %v1355
  %vm1443 = vweird.f32 %v1437
  %vm1444 = vmor %vm1442, %vm1443
  %v1445 = vsel %vm1444, %v1437, %v1441
  %v1446 = vand.u32 2147483647, %v1355
  %vm1447 = vcmp.eq.f32.partialorder %v1446, 8.507059e+37
  %v1448 = vand.u32 %v1355, 2147483648
  %v1449 = vor.u32 1.1754944e-38, %v1448
  %v1450 = vsel %vm1447, %v1449, %v1445
  %v1451 = vmul.f32 %v1333, %v1450
  %v1452 = vrcp.pop %v1358
  %v1453 = vmul.f32 %v1358, %v1452
  %v1454 = vsub.f32 1.0, %v1453
  %v1455 = vmul.f32 %v1452, %v1454
  %v1456 = vadd.f32 %v1452, %v1455
  %vm1457 = vweird.f32 %v1358
  %vm1458 = vweird.f32 %v1452
  %vm1459 = vmor %vm1457, %vm1458
  %v1460 = vsel %vm1459, %v1452, %v1456
  %v1461 = vand.u32 2147483647, %v1358
  %vm1462 = vcmp.eq.f32.partialorder %v1461, 8.507059e+37
  %v1463 = vand.u32 %v1358, 2147483648
  %v1464 = vor.u32 1.1754944e-38, %v1463
  %v1465 = vsel %vm1462, %v1464, %v1460
  %v1466 = vmul.f32 %v1335, %v1465
  %v1467 = vrcp.pop %v1361
  %v1468 = vmul.f32 %v1361, %v1467
  %v1469 = vsub.f32 1.0, %v1468
  %v1470 = vmul.f32 %v1467, %v1469
  %v1471 = vadd.f32 %v1467, %v1470
  %vm1472 = vweird.f32 %v1361
  %vm1473 = vweird.f32 %v1467
  %vm1474 = vmor %vm1472, %vm1473
  %v1475 = vsel %vm1474, %v1467, %v1471
  %v1476 = vand.u32 2147483647, %v1361
  %vm1477 = vcmp.eq.f32.partialorder %v1476, 8.507059e+37
  %v1478 = vand.u32 %v1361, 2147483648
  %v1479 = vor.u32 1.1754944e-38, %v1478
  %v1480 = vsel %vm1477, %v1479, %v1475
  %v1481 = vmul.f32 %v1337, %v1480
  %1482 = vrot.lane.b32.xlu0 %v1123, 64
  %v1483 = vpop.permute.xlu0 %1482
  %1484 = vrot.lane.b32.xlu0 %v1126, 64
  %v1485 = vpop.permute.xlu0 %1484
  %v1488 = vsel %vm394, %v1376, 0
  %v1491 = vsel %vm394, %v1391, 0
  %v1493 = vsel %vm599, %v1485, 0
  %1495 = vmatpush.msra.mxu0 0.0
  %1496 = vmatpush.msra.mxu0 0.0
  %1497 = vmatpush.msra.mxu0 0.0
  %1498 = vmatpush.msra.mxu0 0.0
  %1499 = vmatpush.msra.mxu0 0.0
  %1500 = vmatpush.msra.mxu0 0.0
  %1501 = vmatpush.msra.mxu0 0.0
  %1502 = vmatpush.msra.mxu0 0.0
  %1503 = vmatpush.msra.mxu0 0.0
  %1504 = vmatpush.msra.mxu0 0.0
  %1505 = vmatpush.msra.mxu0 0.0
  %1506 = vmatpush.msra.mxu0 0.0
  %1507 = vmatpush.msra.mxu0 0.0
  %1508 = vmatpush.msra.mxu0 0.0
  %1509 = vmatpush.msra.mxu0 %v1493
  %1510 = vmatpush.msra.mxu0 %v1483
  %1511 = vmatmul.f32.gmra.mxu0 %v1488
  %v1512 = vpop.f32.mrf.mxu0
  %v1513 = vadd.f32 0.0, %v1512
  %1514 = vmatmul.f32.gmra.mxu0 %v1491
  %v1515 = vpop.f32.mrf.mxu0
  %v1516 = vadd.f32 0.0, %v1515
  %1517 = vdwg.mxu0
  %1518 = vrot.lane.b32.xlu0 %v1123, 56
  %v1519 = vpop.permute.xlu0 %1518
  %1520 = vrot.lane.b32.xlu0 %v1126, 56
  %v1521 = vpop.permute.xlu0 %1520
  %v1524 = vsel %vm394, %v1406, 0
  %v1527 = vsel %vm394, %v1421, 0
  %v1529 = vsel %vm599, %v1521, 0
  %1531 = vmatpush.msra.mxu0 0.0
  %1532 = vmatpush.msra.mxu0 0.0
  %1533 = vmatpush.msra.mxu0 0.0
  %1534 = vmatpush.msra.mxu0 0.0
  %1535 = vmatpush.msra.mxu0 0.0
  %1536 = vmatpush.msra.mxu0 0.0
  %1537 = vmatpush.msra.mxu0 0.0
  %1538 = vmatpush.msra.mxu0 0.0
  %1539 = vmatpush.msra.mxu0 0.0
  %1540 = vmatpush.msra.mxu0 0.0
  %1541 = vmatpush.msra.mxu0 0.0
  %1542 = vmatpush.msra.mxu0 0.0
  %1543 = vmatpush.msra.mxu0 0.0
  %1544 = vmatpush.msra.mxu0 0.0
  %1545 = vmatpush.msra.mxu0 %v1529
  %1546 = vmatpush.msra.mxu0 %v1519
  %1547 = vmatmul.f32.gmra.mxu0 %v1524
  %v1548 = vpop.f32.mrf.mxu0
  %v1549 = vadd.f32 0.0, %v1548
  %1550 = vmatmul.f32.gmra.mxu0 %v1527
  %v1551 = vpop.f32.mrf.mxu0
  %v1552 = vadd.f32 0.0, %v1551
  %1553 = vdwg.mxu0
  %1554 = vrot.lane.b32.xlu0 %v1123, 48
  %v1555 = vpop.permute.xlu0 %1554
  %1556 = vrot.lane.b32.xlu0 %v1126, 48
  %v1557 = vpop.permute.xlu0 %1556
  %v1560 = vsel %vm394, %v1436, 0
  %v1563 = vsel %vm394, %v1451, 0
  %v1565 = vsel %vm599, %v1557, 0
  %1567 = vmatpush.msra.mxu0 0.0
  %1568 = vmatpush.msra.mxu0 0.0
  %1569 = vmatpush.msra.mxu0 0.0
  %1570 = vmatpush.msra.mxu0 0.0
  %1571 = vmatpush.msra.mxu0 0.0
  %1572 = vmatpush.msra.mxu0 0.0
  %1573 = vmatpush.msra.mxu0 0.0
  %1574 = vmatpush.msra.mxu0 0.0
  %1575 = vmatpush.msra.mxu0 0.0
  %1576 = vmatpush.msra.mxu0 0.0
  %1577 = vmatpush.msra.mxu0 0.0
  %1578 = vmatpush.msra.mxu0 0.0
  %1579 = vmatpush.msra.mxu0 0.0
  %1580 = vmatpush.msra.mxu0 0.0
  %1581 = vmatpush.msra.mxu0 %v1565
  %1582 = vmatpush.msra.mxu0 %v1555
  %1583 = vmatmul.f32.gmra.mxu0 %v1560
  %v1584 = vpop.f32.mrf.mxu0
  %v1585 = vadd.f32 0.0, %v1584
  %1586 = vmatmul.f32.gmra.mxu0 %v1563
  %v1587 = vpop.f32.mrf.mxu0
  %v1588 = vadd.f32 0.0, %v1587
  %1589 = vdwg.mxu0
  %1590 = vrot.lane.b32.xlu0 %v1123, 40
  %v1591 = vpop.permute.xlu0 %1590
  %1592 = vrot.lane.b32.xlu0 %v1126, 40
  %v1593 = vpop.permute.xlu0 %1592
  %v1596 = vsel %vm394, %v1466, 0
  %v1599 = vsel %vm394, %v1481, 0
  %v1601 = vsel %vm599, %v1593, 0
  %1603 = vmatpush.msra.mxu0 0.0
  %1604 = vmatpush.msra.mxu0 0.0
  %1605 = vmatpush.msra.mxu0 0.0
  %1606 = vmatpush.msra.mxu0 0.0
  %1607 = vmatpush.msra.mxu0 0.0
  %1608 = vmatpush.msra.mxu0 0.0
  %1609 = vmatpush.msra.mxu0 0.0
  %1610 = vmatpush.msra.mxu0 0.0
  %1611 = vmatpush.msra.mxu0 0.0
  %1612 = vmatpush.msra.mxu0 0.0
  %1613 = vmatpush.msra.mxu0 0.0
  %1614 = vmatpush.msra.mxu0 0.0
  %1615 = vmatpush.msra.mxu0 0.0
  %1616 = vmatpush.msra.mxu0 0.0
  %1617 = vmatpush.msra.mxu0 %v1601
  %1618 = vmatpush.msra.mxu0 %v1591
  %1619 = vmatmul.f32.gmra.mxu0 %v1596
  %v1620 = vpop.f32.mrf.mxu0
  %v1621 = vadd.f32 0.0, %v1620
  %1622 = vmatmul.f32.gmra.mxu0 %v1599
  %v1623 = vpop.f32.mrf.mxu0
  %v1624 = vadd.f32 0.0, %v1623
  %1625 = vdwg.mxu0
  %1628 = vrot.lane.b32.xlu0 %v1549, 8
  %v1629 = vpop.permute.xlu0 %1628
  %1630 = vrot.lane.b32.xlu0 %v1552, 8
  %v1631 = vpop.permute.xlu0 %1630
  %1636 = vrot.lane.b32.xlu0 %v1585, 16
  %v1637 = vpop.permute.xlu0 %1636
  %1638 = vrot.lane.b32.xlu0 %v1588, 16
  %v1639 = vpop.permute.xlu0 %1638
  %1644 = vrot.lane.b32.xlu0 %v1621, 24
  %v1645 = vpop.permute.xlu0 %1644
  %1646 = vrot.lane.b32.xlu0 %v1624, 24
  %v1647 = vpop.permute.xlu0 %1646
  %v1650 = vsel %vm237, %v1513, %v1629
  %v1651 = vsel %vm237, %v1516, %v1631
  %v1652 = vsel %vm759, %v1650, %v1637
  %v1653 = vsel %vm759, %v1651, %v1639
  %v1654 = vsel %vm762, %v1652, %v1645
  %v1655 = vsel %vm762, %v1653, %v1647
  %1660 = vrot.lane.b32.xlu0 %v1026, 32
  %v1661 = vpop.permute.xlu0 %1660
  %1662 = vrot.lane.b32.xlu0 %v1027, 32
  %v1663 = vpop.permute.xlu0 %1662
  %1664 = vrot.lane.b32.xlu0 %v1028, 32
  %v1665 = vpop.permute.xlu0 %1664
  %1666 = vrot.lane.b32.xlu0 %v1029, 32
  %v1667 = vpop.permute.xlu0 %1666
  %1673 = vrot.lane.b32.xlu0 %v1098, 32
  %v1674 = vpop.permute.xlu0 %1673
  %v1677 = vsel %vm139, %v1654, 0
  %v1680 = vsel %vm139, %v1655, 0
  %1682 = vmatpush.msra.mxu0 0.0
  %1683 = vmatpush.msra.mxu0 0.0
  %1684 = vmatpush.msra.mxu0 0.0
  %1685 = vmatpush.msra.mxu0 0.0
  %1686 = vmatpush.msra.mxu0 0.0
  %1687 = vmatpush.msra.mxu0 0.0
  %1688 = vmatpush.msra.mxu0 0.0
  %1689 = vmatpush.msra.mxu0 0.0
  %1690 = vmatpush.msra.mxu0 0.0
  %1691 = vmatpush.msra.mxu0 0.0
  %1692 = vmatpush.msra.mxu0 0.0
  %1693 = vmatpush.msra.mxu0 0.0
  %1694 = vmatpush.msra.mxu0 %v1667
  %1695 = vmatpush.msra.mxu0 %v1665
  %1696 = vmatpush.msra.mxu0 %v1663
  %1697 = vmatpush.msra.mxu0 %v1661
  %1698 = vmatmul.f32.gmra.mxu0 %v1677
  %v1699 = vpop.f32.mrf.mxu0
  %v1700 = vadd.f32 %v1674, %v1699
  %1701 = vmatmul.f32.gmra.mxu0 %v1680
  %v1702 = vpop.f32.mrf.mxu0
  %v1703 = vadd.f32 %v1674, %v1702
  %1704 = vdwg.mxu0
  %v1705 = vadd.f32 %v1023, %v1700
  %v1706 = vadd.f32 %v1024, %v1703
  %v1707 = vsel %vm139, %v1705, 0.0
  %1708 = vadd.xlane.f32.xlu0 %v1707
  %v1709 = vpop.xlane.xlu0 %1708
  %v1710 = vsel %vm143, %v1706, 0.0
  %1711 = vadd.xlane.f32.xlu0 %v1710
  %v1712 = vpop.xlane.xlu0 %1711
  %v1713 = vmul.f32 %v1709, %v153
  %v1714 = vmul.f32 %v1712, %v153
  %v1715 = vsub.f32 %v1705, %v1713
  %v1716 = vsub.f32 %v1706, %v1714
  %v1717 = vmul.f32 %v1715, %v1715
  %v1718 = vmul.f32 %v1716, %v1716
  %v1719 = vsel %vm139, %v1717, 0.0
  %1720 = vadd.xlane.f32.xlu0 %v1719
  %v1721 = vpop.xlane.xlu0 %1720
  %v1722 = vsel %vm143, %v1718, 0.0
  %1723 = vadd.xlane.f32.xlu0 %v1722
  %v1724 = vpop.xlane.xlu0 %1723
  %v1725 = vmul.f32 %v1721, %v153
  %v1726 = vmul.f32 %v1724, %v153
  %v1727 = vadd.f32 %v1725, 1e-12
  %v1728 = vadd.f32 %v1726, 1e-12
  %v1729 = vrsqrt.pop %v1727
  %v1730 = vmul.f32 %v1729, %v1727
  %v1731 = vmul.f32 %v1730, %v1729
  %v1732 = vmul.f32 0.5, %v1731
  %v1733 = vsub.f32 1.5, %v1732
  %v1734 = vmul.f32 %v1729, %v1733
  %vm1735 = vweird.f32 %v1727
  %vm1736 = vweird.f32 %v1729
  %vm1737 = vmor %vm1735, %vm1736
  %v1738 = vsel %vm1737, %v1729, %v1734
  %v1739 = vrsqrt.pop %v1728
  %v1740 = vmul.f32 %v1739, %v1728
  %v1741 = vmul.f32 %v1740, %v1739
  %v1742 = vmul.f32 0.5, %v1741
  %v1743 = vsub.f32 1.5, %v1742
  %v1744 = vmul.f32 %v1739, %v1743
  %vm1745 = vweird.f32 %v1728
  %vm1746 = vweird.f32 %v1739
  %vm1747 = vmor %vm1745, %vm1746
  %v1748 = vsel %vm1747, %v1739, %v1744
  %v1749 = vmul.f32 %v1715, %v1738
  %v1750 = vmul.f32 %v1716, %v1748
  %1751 = vrot.lane.b32.xlu0 %v1089, 64
  %v1752 = vpop.permute.xlu0 %1751
  %v1754 = vmul.f32 %v1749, %v1752
  %v1755 = vmul.f32 %v1750, %v1752
  %1756 = vrot.lane.b32.xlu0 %v1089, 32
  %v1757 = vpop.permute.xlu0 %1756
  %v1759 = vadd.f32 %v1754, %v1757
  %v1760 = vadd.f32 %v1755, %v1757
  %v1761 = vperm.slane %v1044, 0
  %v1763 = vsel %vm139, %v1759, 0
  %v1766 = vsel %vm139, %v1760, 0
  %1768 = vmatpush.msra.mxu0 0.0
  %1769 = vmatpush.msra.mxu0 0.0
  %1770 = vmatpush.msra.mxu0 0.0
  %1771 = vmatpush.msra.mxu0 0.0
  %1772 = vmatpush.msra.mxu0 0.0
  %1773 = vmatpush.msra.mxu0 0.0
  %1774 = vmatpush.msra.mxu0 0.0
  %1775 = vmatpush.msra.mxu0 0.0
  %1776 = vmatpush.msra.mxu0 0.0
  %1777 = vmatpush.msra.mxu0 0.0
  %1778 = vmatpush.msra.mxu0 0.0
  %1779 = vmatpush.msra.mxu0 0.0
  %1780 = vmatpush.msra.mxu0 %v1033
  %1781 = vmatpush.msra.mxu0 %v1032
  %1782 = vmatpush.msra.mxu0 %v1031
  %1783 = vmatpush.msra.mxu0 %v1030
  %1784 = vmatmul.f32.gmra.mxu0 %v1763
  %v1785 = vpop.f32.mrf.mxu0
  %v1786 = vadd.f32 %v1761, %v1785
  %1787 = vmatmul.f32.gmra.mxu0 %v1766
  %v1788 = vpop.f32.mrf.mxu0
  %v1789 = vadd.f32 %v1761, %v1788
  %1790 = vdwg.mxu0
  %v1791 = vmul.f32 %v1786, 0.5
  %v1792 = vmul.f32 %v1789, 0.5
  %v1793 = vmul.f32 %v1786, 0.70710677
  %v1794 = vmul.f32 %v1789, 0.70710677
  %v1795 = vmul.f32 %v1793, %v1793
  %v1796 = vmin.f32 16.0, %v1795
  %v1797 = vmul.f32 %v1796, 2.1237322e-06
  %v1798 = vadd.f32 %v1797, 0.00028619796
  %v1799 = vmul.f32 %v1796, %v1798
  %v1800 = vadd.f32 %v1799, 0.0036580483
  %v1801 = vmul.f32 %v1796, %v1800
  %v1802 = vadd.f32 %v1801, 0.05243302
  %v1803 = vmul.f32 %v1796, %v1802
  %v1804 = vadd.f32 %v1803, 0.18741608
  %v1805 = vmul.f32 %v1796, %v1804
  %v1806 = vadd.f32 %v1805, 1.1283791
  %v1807 = vmul.f32 %v1793, %v1806
  %v1808 = vmul.f32 %v1796, 3.8918573e-05
  %v1809 = vadd.f32 %v1808, 0.001143296
  %v1810 = vmul.f32 %v1796, %v1809
  %v1811 = vadd.f32 %v1810, 0.014752088
  %v1812 = vmul.f32 %v1796, %v1811
  %v1813 = vadd.f32 %v1812, 0.112945676
  %v1814 = vmul.f32 %v1796, %v1813
  %v1815 = vadd.f32 %v1814, 0.4994258
  %v1816 = vmul.f32 %v1796, %v1815
  %v1817 = vadd.f32 %v1816, 1.0
  %v1818 = vrcp.pop %v1817
  %v1819 = vmul.f32 %v1817, %v1818
  %v1820 = vsub.f32 1.0, %v1819
  %v1821 = vmul.f32 %v1818, %v1820
  %v1822 = vadd.f32 %v1818, %v1821
  %vm1823 = vweird.f32 %v1817
  %vm1824 = vweird.f32 %v1818
  %vm1825 = vmor %vm1823, %vm1824
  %v1826 = vsel %vm1825, %v1818, %v1822
  %v1827 = vand.u32 2147483647, %v1817
  %vm1828 = vcmp.eq.f32.partialorder %v1827, 8.507059e+37
  %v1829 = vand.u32 %v1817, 2147483648
  %v1830 = vor.u32 1.1754944e-38, %v1829
  %v1831 = vsel %vm1828, %v1830, %v1826
  %v1832 = vmul.f32 %v1807, %v1831
  %v1833 = vmin.f32 %v1832, 1.0
  %v1834 = vmax.f32 %v1833, -1.0
  %v1835 = vmul.f32 %v1794, %v1794
  %v1836 = vmin.f32 16.0, %v1835
  %v1837 = vmul.f32 %v1836, 2.1237322e-06
  %v1838 = vadd.f32 %v1837, 0.00028619796
  %v1839 = vmul.f32 %v1836, %v1838
  %v1840 = vadd.f32 %v1839, 0.0036580483
  %v1841 = vmul.f32 %v1836, %v1840
  %v1842 = vadd.f32 %v1841, 0.05243302
  %v1843 = vmul.f32 %v1836, %v1842
  %v1844 = vadd.f32 %v1843, 0.18741608
  %v1845 = vmul.f32 %v1836, %v1844
  %v1846 = vadd.f32 %v1845, 1.1283791
  %v1847 = vmul.f32 %v1794, %v1846
  %v1848 = vmul.f32 %v1836, 3.8918573e-05
  %v1849 = vadd.f32 %v1848, 0.001143296
  %v1850 = vmul.f32 %v1836, %v1849
  %v1851 = vadd.f32 %v1850, 0.014752088
  %v1852 = vmul.f32 %v1836, %v1851
  %v1853 = vadd.f32 %v1852, 0.112945676
  %v1854 = vmul.f32 %v1836, %v1853
  %v1855 = vadd.f32 %v1854, 0.4994258
  %v1856 = vmul.f32 %v1836, %v1855
  %v1857 = vadd.f32 %v1856, 1.0
  %v1858 = vrcp.pop %v1857
  %v1859 = vmul.f32 %v1857, %v1858
  %v1860 = vsub.f32 1.0, %v1859
  %v1861 = vmul.f32 %v1858, %v1860
  %v1862 = vadd.f32 %v1858, %v1861
  %vm1863 = vweird.f32 %v1857
  %vm1864 = vweird.f32 %v1858
  %vm1865 = vmor %vm1863, %vm1864
  %v1866 = vsel %vm1865, %v1858, %v1862
  %v1867 = vand.u32 2147483647, %v1857
  %vm1868 = vcmp.eq.f32.partialorder %v1867, 8.507059e+37
  %v1869 = vand.u32 %v1857, 2147483648
  %v1870 = vor.u32 1.1754944e-38, %v1869
  %v1871 = vsel %vm1868, %v1870, %v1866
  %v1872 = vmul.f32 %v1847, %v1871
  %v1873 = vmin.f32 %v1872, 1.0
  %v1874 = vmax.f32 %v1873, -1.0
  %v1875 = vadd.f32 %v1834, 1.0
  %v1876 = vadd.f32 %v1874, 1.0
  %v1877 = vmul.f32 %v1791, %v1875
  %v1878 = vmul.f32 %v1792, %v1876
  %v1880 = vsel %vm53, %v1877, 0
  %v1883 = vsel %vm53, %v1878, 0
  %1885 = vmatpush.msra.mxu0 0.0
  %1886 = vmatpush.msra.mxu0 0.0
  %1887 = vmatpush.msra.mxu0 0.0
  %1888 = vmatpush.msra.mxu0 0.0
  %1889 = vmatpush.msra.mxu0 0.0
  %1890 = vmatpush.msra.mxu0 0.0
  %1891 = vmatpush.msra.mxu0 0.0
  %1892 = vmatpush.msra.mxu0 0.0
  %1893 = vmatpush.msra.mxu0 %v1041
  %1894 = vmatpush.msra.mxu0 %v1040
  %1895 = vmatpush.msra.mxu0 %v1039
  %1896 = vmatpush.msra.mxu0 %v1038
  %1897 = vmatpush.msra.mxu0 %v1037
  %1898 = vmatpush.msra.mxu0 %v1036
  %1899 = vmatpush.msra.mxu0 %v1035
  %1900 = vmatpush.msra.mxu0 %v1034
  %1901 = vmatmul.f32.gmra.mxu0 %v1880
  %v1902 = vpop.f32.mrf.mxu0
  %v1903 = vadd.f32 0.0, %v1902
  %1904 = vmatmul.f32.gmra.mxu0 %v1883
  %v1905 = vpop.f32.mrf.mxu0
  %1906 = vdwg.mxu0
  %v1907 = vadd.f32 %v1705, %v1903
  %1909 = vrot.lane.b32.xlu0 %v1761, 64
  %v1910 = vpop.permute.xlu0 %1909
  %v1912 = vadd.f32 %v1907, %v1910
  %v1914 = vrot.slane %v1912, 4
  %v1916 = vsel %vm114, %v1912, %v1914
  %v1917 = vsel %vm143, %v1916, 0.0
  %1918 = vadd.xlane.f32.xlu0 %v1917
  %v1919 = vpop.xlane.xlu0 %1918
  %v1920 = vmul.f32 %v1919, %v153
  %v1921 = vsub.f32 %v1916, %v1920
  %v1922 = vmul.f32 %v1921, %v1921
  %v1923 = vsel %vm143, %v1922, 0.0
  %1924 = vadd.xlane.f32.xlu0 %v1923
  %v1925 = vpop.xlane.xlu0 %1924
  %v1926 = vmul.f32 %v1925, %v153
  %v1927 = vadd.f32 %v1926, 1e-12
  %v1928 = vrsqrt.pop %v1927
  %v1929 = vmul.f32 %v1928, %v1927
  %v1930 = vmul.f32 %v1929, %v1928
  %v1931 = vmul.f32 0.5, %v1930
  %v1932 = vsub.f32 1.5, %v1931
  %v1933 = vmul.f32 %v1928, %v1932
  %vm1934 = vweird.f32 %v1927
  %vm1935 = vweird.f32 %v1928
  %vm1936 = vmor %vm1934, %vm1935
  %v1937 = vsel %vm1936, %v1928, %v1933
  %v1938 = vmul.f32 %v1921, %v1937
  %v1939 = vperm.slane %v40, 0
  %v1940 = vmul.f32 %v1938, %v1939
  %v1941 = vperm.slane %v41, 0
  %v1942 = vadd.f32 %v1940, %v1941
  %v1944 = vsel %vm139, %v1942, 0
  %1946 = vmatpush.msra.mxu0 0.0
  %1947 = vmatpush.msra.mxu0 0.0
  %1948 = vmatpush.msra.mxu0 0.0
  %1949 = vmatpush.msra.mxu0 0.0
  %1950 = vmatpush.msra.mxu0 0.0
  %1951 = vmatpush.msra.mxu0 0.0
  %1952 = vmatpush.msra.mxu0 0.0
  %1953 = vmatpush.msra.mxu0 0.0
  %1954 = vmatpush.msra.mxu0 0.0
  %1955 = vmatpush.msra.mxu0 0.0
  %1956 = vmatpush.msra.mxu0 0.0
  %1957 = vmatpush.msra.mxu0 0.0
  %1958 = vmatpush.msra.mxu0 %v47
  %1959 = vmatpush.msra.mxu0 %v46
  %1960 = vmatpush.msra.mxu0 %v45
  %1961 = vmatpush.msra.mxu0 %v44
  %1962 = vmatmul.f32.gmra.mxu0 %v1944
  %v1963 = vpop.f32.mrf.mxu0
  %v1964 = vadd.f32 0.0, %v1963
  %1965 = vdwg.mxu0
  %v1966 = vperm.slane %v42, 0
  %v1967 = vadd.f32 %v1964, %v1966
  %vm1968 = vcmask 25600
  %1969 = vst.msk [vmem:[%s3] sm:$0x3] %vm1968, %v1967
  // Predicated region
  $region14: #{vit_forward.1} parent=0 // pred_check
    _
  $region15: #{vit_forward.1} parent=0 // pred_check_branch
    %1971 = sbr.rel (0) target = $region17
  $region16: #{vit_forward.1} parent=0 // pred_region
    _
  $region17: #{vit_forward.1} parent=0 // pred_fallthru
    _
  // Predicated region
  $region18: #{vit_forward.1} parent=0 // pred_check
    _
  $region19: #{vit_forward.1} parent=0 // pred_check_branch
    %1973 = sbr.rel (0) target = $region21
  $region20: #{vit_forward.1} parent=0 // pred_region
    _
  $region21: #{vit_forward.1} parent=0 // pred_fallthru
    _

</llo_original>
